<compile_context>
chip_gen: v5e
topology: v5e:2x2
jax: 0.10.0
libtpu: 0.0.40
codegen_flags: <defaults>
</compile_context>

<pallas_src>
import functools

import jax
import jax.numpy as jnp
from jax.experimental import pallas as pl
from jax.experimental.pallas import tpu as pltpu


# --------------------------------------------------------------------------- helpers
def _pick_tile(n, target, align):
    """Largest tile <= target that divides n and respects TPU tiling alignment."""
    if n <= target:
        return n
    t = (target // align) * align
    while t >= align:
        if n % t == 0:
            return t
        t -= align
    return n


# --------------------------------------------------------------------------- kernels
def _mm_acc_kernel(x_ref, w_ref, o_ref, acc_ref):
    """o = x @ w with a K-reduction on grid axis 2; bf16 operands, f32 accumulator."""
    @pl.when(pl.program_id(2) == 0)
    def _init():
        acc_ref[...] = jnp.zeros_like(acc_ref)

    acc_ref[...] += jnp.dot(x_ref[...].astype(jnp.bfloat16),
                            w_ref[...].astype(jnp.bfloat16),
                            preferred_element_type=jnp.float32)

    @pl.when(pl.program_id(2) == pl.num_programs(2) - 1)
    def _store():
        o_ref[...] = acc_ref[...].astype(o_ref.dtype)


def _attn_kernel(q_ref, k_ref, v_ref, rk_ref, rwb_ref, rrb_ref, mask_ref,
                 ow_ref, res_ref, g_ref, b_ref, o_ref,
                 *, n_head, d_head, scale, use_roll):
    # q_ref   : (tq,   H*D) bf16   query rows of this tile
    # k_ref   : (klen, H*D) bf16
    # v_ref   : (klen, H*D) bf16
    # rk_ref  : (rlen=klen, H*D) bf16   positional keys (r_net output)
    # rwb_ref : (1, H*D) f32  r_w_bias     rrb_ref : (1, H*D) f32  r_r_bias
    # mask_ref: (tq, klen) f32, nonzero == masked
    # ow_ref  : (H*D, d_model) bf16  o_net weight
    # res_ref : (tq, d_model) f32   residual rows (dec_inp)
    # g_ref/b_ref: (1, d_model) f32 LayerNorm gamma/beta
    # o_ref   : (tq, d_model) f32   LayerNorm(residual + attn_out)
    tq = q_ref.shape[0]
    klen = k_ref.shape[0]
    q_start = pl.program_id(1) * tq

    mask = mask_ref[...] > 0.5                                     # (tq, klen) bool

    # Relative shift (mems=None, rlen == klen):
    #   BD_shifted[i, j] = BD[i, (j - i - 1) mod klen]
    # i.e. a right-rotation of row i by (i + 1) mod klen along the key axis.  Done as
    # log2(klen) static lane rotations, each blended in per-row from the bits of the
    # rotation amount (pltpu.roll hits the XLU slot -> overlaps with MXU work; the
    # concat fallback keeps small / unaligned klen lowering on the known-good path).
    row = jax.lax.broadcasted_iota(jnp.int32, (tq, klen), 0) + q_start
    amount = jnp.where(row + 1 == klen, 0, row + 1)                # (i + 1) mod klen
    rot_stages = []                                                # [(rotation, select)]
    bit = 1
    while bit < klen:
        rot_stages.append((bit, (amount & bit) != 0))
        bit <<= 1

    dn_t = (((1,), (1,)), ((), ()))   # contract last dims: (tq,D) x (klen,D) -> (tq,klen)
    outs = []
    for h in range(n_head):
        lo, hi = h * d_head, (h + 1) * d_head
        q_h = q_ref[:, lo:hi].astype(jnp.float32)                  # (tq, D)
        # 1/sqrt(d_head) folded into the (query + bias) operand (tq*D muls, not tq*klen).
        q_ac = ((q_h + rwb_ref[:, lo:hi]) * scale).astype(jnp.bfloat16)
        q_bd = ((q_h + rrb_ref[:, lo:hi]) * scale).astype(jnp.bfloat16)

        ac = jax.lax.dot_general(q_ac, k_ref[:, lo:hi], dn_t,
                                 preferred_element_type=jnp.float32)   # (tq, klen)
        bd = jax.lax.dot_general(q_bd, rk_ref[:, lo:hi], dn_t,
                                 preferred_element_type=jnp.float32)   # (tq, klen)
        for rot, sel in rot_stages:
            if use_roll:
                rolled = pltpu.roll(bd, shift=rot, axis=1)
            else:
                rolled = jnp.concatenate([bd[:, klen - rot:], bd[:, :klen - rot]],
                                         axis=1)
            bd = jnp.where(sel, rolled, bd)

        score = jnp.where(mask, -1e30, ac + bd)        # finite fill: NaN-safe softmax
        m = jnp.max(score, axis=-1, keepdims=True)
        p = jnp.exp(score - m)
        p = p * pl.reciprocal(jnp.sum(p, axis=-1, keepdims=True), approx=True)
        outs.append(jnp.dot(p.astype(jnp.bfloat16), v_ref[:, lo:hi],
                            preferred_element_type=jnp.float32))       # (tq, D)

    # Fused output projection + residual + LayerNorm (attn_vec never leaves VMEM).
    attn_vec = jnp.concatenate(outs, axis=-1).astype(jnp.bfloat16)     # (tq, H*D)
    attn_out = jnp.dot(attn_vec, ow_ref[...],
                       preferred_element_type=jnp.float32)             # (tq, d_model)
    x = res_ref[...] + attn_out
    mu = jnp.mean(x, axis=-1, keepdims=True)
    var = jnp.mean(jnp.square(x - mu), axis=-1, keepdims=True)
    o_ref[...] = (x - mu) * jax.lax.rsqrt(var + 1e-5) * g_ref[...] + b_ref[...]


def _ff_kernel(x_ref, w1_ref, b1_ref, w2_ref, b2_ref, g_ref, bb_ref, o_ref):
    # PositionwiseFF (post-LN): LayerNorm(x + W2 @ relu(W1 @ x + b1) + b2)
    x = x_ref[...]
    h = jnp.dot(x.astype(jnp.bfloat16), w1_ref[...].astype(jnp.bfloat16),
                preferred_element_type=jnp.float32) + b1_ref[...]
    h = jnp.maximum(h, 0.0)
    core = jnp.dot(h.astype(jnp.bfloat16), w2_ref[...].astype(jnp.bfloat16),
                   preferred_element_type=jnp.float32) + b2_ref[...]
    y = x + core
    mu = jnp.mean(y, axis=-1, keepdims=True)
    var = jnp.mean(jnp.square(y - mu), axis=-1, keepdims=True)
    o_ref[...] = (y - mu) * jax.lax.rsqrt(var + 1e-5) * g_ref[...] + bb_ref[...]


# --------------------------------------------------------------------------- glue
def _matmul_bf16(x, w):
    """(M, K) @ (K, N) -> (M, N) bf16, tiled with a K accumulator."""
    M, K = x.shape
    N = w.shape[1]
    tm = _pick_tile(M, 512, 8)
    tn = _pick_tile(N, 512, 128)
    tk = _pick_tile(K, 512, 128)
    return pl.pallas_call(
        _mm_acc_kernel,
        out_shape=jax.ShapeDtypeStruct((M, N), jnp.bfloat16),
        grid=(M // tm, N // tn, K // tk),
        in_specs=[pl.BlockSpec((tm, tk), lambda i, j, k: (i, k)),
                  pl.BlockSpec((tk, tn), lambda i, j, k: (k, j))],
        out_specs=pl.BlockSpec((tm, tn), lambda i, j, k: (i, j)),
        scratch_shapes=[pltpu.VMEM((tm, tn), jnp.float32)],
        compiler_params=pltpu.CompilerParams(
            dimension_semantics=("parallel", "parallel", "arbitrary")),
    )(x, w)


def _qkv_proj(x2d, w3):
    """x2d: (rows, d_model) f32, w3: (3, d_model, H*D) bf16 -> (3, rows, H*D) bf16.

    Writes q/k/v directly as leading-dim chunks so the attention kernel consumes them
    without any XLA transpose or last-dim slicing copies."""
    M, K = x2d.shape
    HD = w3.shape[2]
    tm = _pick_tile(M, 512, 8)
    tk = _pick_tile(K, 512, 128)
    return pl.pallas_call(
        _mm_acc_kernel,
        out_shape=jax.ShapeDtypeStruct((3, M, HD), jnp.bfloat16),
        grid=(3, M // tm, K // tk),
        in_specs=[pl.BlockSpec((tm, tk), lambda c, i, k: (i, k)),
                  pl.BlockSpec((None, tk, HD), lambda c, i, k: (c, k, 0))],
        out_specs=pl.BlockSpec((None, tm, HD), lambda c, i, k: (c, i, 0)),
        scratch_shapes=[pltpu.VMEM((tm, HD), jnp.float32)],
        compiler_params=pltpu.CompilerParams(
            dimension_semantics=("parallel", "parallel", "arbitrary")),
    )(x2d, w3)


def _rel_attention_oproj_ln(q_p, k_p, v_p, rk, rwb2, rrb2, mask,
                            o_w, res_bm, g, b, *, n_head, d_head, scale):
    """Fused: AC + BD + rel-shift + mask + softmax + P@V + W_o + residual + LayerNorm."""
    bsz, qlen, hd = q_p.shape
    klen = k_p.shape[1]
    d_model = o_w.shape[1]
    tq = _pick_tile(qlen, 256, 8)
    use_roll = (klen % 128 == 0)
    # TODO(synk): for very long sequences also tile klen with an online-softmax (flash)
    #             accumulator; here klen is kept resident per (batch, q-tile).
    kernel = functools.partial(_attn_kernel, n_head=n_head, d_head=d_head,
                               scale=scale, use_roll=use_roll)
    return pl.pallas_call(
        kernel,
        out_shape=jax.ShapeDtypeStruct((bsz, qlen, d_model), jnp.float32),
        grid=(bsz, qlen // tq),
        in_specs=[pl.BlockSpec((None, tq, hd), lambda bi, qi: (bi, qi, 0)),
                  pl.BlockSpec((None, klen, hd), lambda bi, qi: (bi, 0, 0)),
                  pl.BlockSpec((None, klen, hd), lambda bi, qi: (bi, 0, 0)),
                  pl.BlockSpec((klen, hd), lambda bi, qi: (0, 0)),
                  pl.BlockSpec((1, hd), lambda bi, qi: (0, 0)),
                  pl.BlockSpec((1, hd), lambda bi, qi: (0, 0)),
                  pl.BlockSpec((tq, klen), lambda bi, qi: (qi, 0)),
                  pl.BlockSpec((hd, d_model), lambda bi, qi: (0, 0)),
                  pl.BlockSpec((None, tq, d_model), lambda bi, qi: (bi, qi, 0)),
                  pl.BlockSpec((1, d_model), lambda bi, qi: (0, 0)),
                  pl.BlockSpec((1, d_model), lambda bi, qi: (0, 0))],
        out_specs=pl.BlockSpec((None, tq, d_model), lambda bi, qi: (bi, qi, 0)),
        compiler_params=pltpu.CompilerParams(
            dimension_semantics=("parallel", "parallel")),
    )(q_p, k_p, v_p, rk, rwb2, rrb2, mask, o_w, res_bm, g, b)


def _pos_ff(x2d, w1, b1, w2, b2, g, b):
    M, d_model = x2d.shape
    d_inner = w1.shape[1]
    tm = _pick_tile(M, 256, 8)
    # TODO(synk): for very large d_inner, add an "arbitrary" d_inner grid axis with a
    #             VMEM accumulator instead of keeping the (tm, d_inner) hidden in VMEM.
    return pl.pallas_call(
        _ff_kernel,
        out_shape=jax.ShapeDtypeStruct((M, d_model), jnp.float32),
        grid=(M // tm,),
        in_specs=[pl.BlockSpec((tm, d_model), lambda i: (i, 0)),
                  pl.BlockSpec((d_model, d_inner), lambda i: (0, 0)),
                  pl.BlockSpec((1, d_inner), lambda i: (0, 0)),
                  pl.BlockSpec((d_inner, d_model), lambda i: (0, 0)),
                  pl.BlockSpec((1, d_model), lambda i: (0, 0)),
                  pl.BlockSpec((1, d_model), lambda i: (0, 0)),
                  pl.BlockSpec((1, d_model), lambda i: (0, 0))],
        out_specs=pl.BlockSpec((tm, d_model), lambda i: (i, 0)),
        compiler_params=pltpu.CompilerParams(dimension_semantics=("parallel",)),
    )(x2d, w1, b1, w2, b2, g, b)


# --------------------------------------------------------------------------- forward
def rel_partial_decoder_layer(dec_inp, r, r_w_bias, r_r_bias, params, dec_attn_mask):
    qlen, bsz, d_model = dec_inp.shape
    rlen = r.shape[0]
    n_head, d_head = r_w_bias.shape
    hd = n_head * d_head
    klen = qlen                       # mems=None
    assert rlen == klen, "in-kernel rel-shift assumes rlen == klen (mems=None)"
    scale = 1.0 / (d_head ** 0.5)

    # Batch-major layout so every downstream block is lane-dense (last dim = H*D / d_model).
    x_bm = jnp.transpose(dec_inp, (1, 0, 2))                 # (bsz, qlen, d_model)
    x2d = x_bm.reshape(bsz * qlen, d_model)

    # QKV projection -> (3, rows, H*D) bf16; q/k/v are free leading-dim views.
    # Weights pre-cast to bf16 once so repeated per-tile weight DMAs move half the bytes.
    w3 = jnp.transpose(params["qkv_w"].reshape(d_model, 3, hd),
                       (1, 0, 2)).astype(jnp.bfloat16)
    qkv = _qkv_proj(x2d, w3)
    q_p = qkv[0].reshape(bsz, qlen, hd)
    k_p = qkv[1].reshape(bsz, qlen, hd)
    v_p = qkv[2].reshape(bsz, qlen, hd)

    rk = _matmul_bf16(r, params["r_w"].astype(jnp.bfloat16))  # (rlen, H*D) bf16
    rwb2 = r_w_bias.reshape(1, hd).astype(jnp.float32)
    rrb2 = r_r_bias.reshape(1, hd).astype(jnp.float32)

    # Fused: AC + BD + rel-shift + mask + softmax + P@V + o_net + residual + LayerNorm.
    attn_ln = _rel_attention_oproj_ln(
        q_p, k_p, v_p, rk, rwb2, rrb2, dec_attn_mask.astype(jnp.float32),
        params["o_w"].astype(jnp.bfloat16), x_bm,
        params["ln1_g"], params["ln1_b"],
        n_head=n_head, d_head=d_head, scale=scale)           # (bsz, qlen, d_model) f32

    ff_out = _pos_ff(attn_ln.reshape(bsz * qlen, d_model),
                     params["ff_w1"].astype(jnp.bfloat16), params["ff_b1"],
                     params["ff_w2"].astype(jnp.bfloat16), params["ff_b2"],
                     params["ln2_g"], params["ln2_b"])       # (rows, d_model) f32

    return jnp.transpose(ff_out.reshape(bsz, qlen, d_model), (1, 0, 2))


# --------------------------------------------------------------------------- reference
def _reference(dec_inp, r, r_w_bias, r_r_bias, params, dec_attn_mask):
    """Straightforward f32 JAX port of the PyTorch module (eval mode, mems=None)."""
    qlen, bsz, d_model = dec_inp.shape
    rlen = r.shape[0]
    n_head, d_head = r_w_bias.shape
    scale = 1.0 / (d_head ** 0.5)

    w2d = dec_inp.reshape(qlen * bsz, d_model)
    w_heads = (w2d @ params["qkv_w"]).reshape(qlen, bsz, 3, n_head, d_head)
    r_head_k = (r @ params["r_w"]).reshape(rlen, n_head, d_head)
    w_head_q, w_head_k, w_head_v = w_heads[:, :, 0], w_heads[:, :, 1], w_heads[:, :, 2]

    AC = jnp.einsum("ibnd,jbnd->bnij", w_head_q + r_w_bias, w_head_k)
    BD = jnp.einsum("ibnd,jnd->bnij", w_head_q + r_r_bias, r_head_k)
    b_, n_, q_, r_ = BD.shape
    zero_pad = jnp.zeros((b_, n_, q_, 1), BD.dtype)
    BD = jnp.concatenate([zero_pad, BD], axis=3).reshape(b_, n_, r_ + 1, q_)
    BD = BD[:, :, 1:, :].reshape(b_, n_, q_, r_)

    score = (AC + BD) * scale
    score = jnp.where(dec_attn_mask[None, None] > 0.5, -jnp.inf, score)
    prob = jax.nn.softmax(score, axis=3)
    attn_vec = jnp.einsum("bnij,jbnd->ibnd", prob, w_head_v)
    attn_vec = attn_vec.reshape(qlen, bsz, n_head * d_head)
    attn_out = attn_vec @ params["o_w"]

    def ln(x, g, b):
        mu = x.mean(-1, keepdims=True)
        var = ((x - mu) ** 2).mean(-1, keepdims=True)
        return (x - mu) * jax.lax.rsqrt(var + 1e-5) * g.reshape(-1) + b.reshape(-1)

    out1 = ln(dec_inp + attn_out, params["ln1_g"], params["ln1_b"])
    h = jnp.maximum(out1 @ params["ff_w1"] + params["ff_b1"].reshape(-1), 0.0)
    core = h @ params["ff_w2"] + params["ff_b2"].reshape(-1)
    return ln(out1 + core, params["ln2_g"], params["ln2_b"])


# --------------------------------------------------------------------------- main
if __name__ == "__main__":
    n_head, d_model, d_head, d_inner = 2, 32, 16, 64
    qlen, bsz = 8, 2
    rlen = klen = qlen                 # mems=None

    key = jax.random.PRNGKey(0)
    keys = jax.random.split(key, 12)

    def init(k, shape, s=0.02):
        return (s * jax.random.normal(k, shape)).astype(jnp.float32)

    # Weights stored pre-transposed: y = x @ W  (PyTorch Linear stores W^T).
    params = {
        "qkv_w": init(keys[0], (d_model, 3 * n_head * d_head)),   # qkv_net (no bias)
        "r_w":   init(keys[1], (d_model, n_head * d_head)),       # r_net   (no bias)
        "o_w":   init(keys[2], (n_head * d_head, d_model)),       # o_net   (no bias)
        "ln1_g": jnp.ones((1, d_model), jnp.float32),
        "ln1_b": jnp.zeros((1, d_model), jnp.float32),
        "ff_w1": init(keys[3], (d_model, d_inner)),
        "ff_b1": init(keys[4], (1, d_inner)),
        "ff_w2": init(keys[5], (d_inner, d_model)),
        "ff_b2": init(keys[6], (1, d_model)),
        "ln2_g": jnp.ones((1, d_model), jnp.float32),
        "ln2_b": jnp.zeros((1, d_model), jnp.float32),
    }

    dec_inp = jax.random.normal(keys[7], (qlen, bsz, d_model), jnp.float32)
    r = jax.random.normal(keys[8], (rlen, d_model), jnp.float32)
    r_w_bias = init(keys[9], (n_head, d_head), 0.1)
    r_r_bias = init(keys[10], (n_head, d_head), 0.1)
    # causal mask (Transformer-XL, mem_len=0): 1.0 where attention is disallowed
    dec_attn_mask = jnp.triu(jnp.ones((qlen, klen), jnp.float32), k=1)

    fwd = jax.jit(rel_partial_decoder_layer)
    out = jax.block_until_ready(fwd(dec_inp, r, r_w_bias, r_r_bias, params, dec_attn_mask))

    assert out.shape == (qlen, bsz, d_model)
    assert bool(jnp.all(jnp.isfinite(out)))

    # numerical sanity check vs a plain f32 JAX port of the PyTorch module
    ref = _reference(dec_inp, r, r_w_bias, r_r_bias, params, dec_attn_mask)
    max_err = float(jnp.max(jnp.abs(out - ref)))
    assert max_err < 5e-2, f"mismatch vs reference: {max_err}"

    print("KERNEL_OK")
</pallas_src>

<mosaic_0001>
module attributes {stable_mosaic.version = 11 : i64} {
  func.func @_mm_acc_kernel(%arg0: i32, %arg1: i32, %arg2: i32, %arg3: memref<8x32xf32, #tpu.memory_space<vmem>>, %arg4: memref<32x32xbf16, #tpu.memory_space<vmem>>, %arg5: memref<8x32xbf16, #tpu.memory_space<vmem>>, %arg6: memref<8x32xf32, #tpu.memory_space<vmem>>) attributes {dimension_semantics = [#tpu.dimension_semantics<parallel>, #tpu.dimension_semantics<parallel>, #tpu.dimension_semantics<arbitrary>], iteration_bounds = array<i64: 1, 1, 1>, scalar_prefetch = 0 : i64, scratch_operands = 1 : i64, tpu.core_type = #tpu.core_type<tc>, window_params = [{transform_indices = @transform_0, window_bounds = array<i64: 8, 32>}, {transform_indices = @transform_1, window_bounds = array<i64: 32, 32>}, {transform_indices = @transform_2, window_bounds = array<i64: 8, 32>}]} {
    %c0_i32 = arith.constant 0 : i32
    %0 = arith.cmpi eq, %arg2, %c0_i32 : i32
    %1 = arith.extui %0 : i1 to i32
    %c0_i32_0 = arith.constant 0 : i32
    %2 = arith.cmpi ne, %1, %c0_i32_0 : i32
    scf.if %2 {
      %cst_10 = arith.constant 0.000000e+00 : f32
      %13 = vector.broadcast %cst_10 : f32 to vector<8x32xf32>
      %c0_11 = arith.constant 0 : index
      %c0_12 = arith.constant 0 : index
      %14 = vector.load %arg6[%c0_11, %c0_12] : memref<8x32xf32, #tpu.memory_space<vmem>>, vector<8x32xf32>
      tpu.vector_store %arg6[%c0_11, %c0_12], %13 {strides = array<i32>} : memref<8x32xf32, #tpu.memory_space<vmem>>, vector<8x32xf32>,
    } else {
    }
    %c0 = arith.constant 0 : index
    %c0_1 = arith.constant 0 : index
    %3 = vector.load %arg6[%c0, %c0_1] : memref<8x32xf32, #tpu.memory_space<vmem>>, vector<8x32xf32>
    %c0_2 = arith.constant 0 : index
    %c0_3 = arith.constant 0 : index
    %4 = vector.load %arg3[%c0_2, %c0_3] : memref<8x32xf32, #tpu.memory_space<vmem>>, vector<8x32xf32>
    %5 = arith.truncf %4 : vector<8x32xf32> to vector<8x32xbf16>
    %c0_4 = arith.constant 0 : index
    %c0_5 = arith.constant 0 : index
    %6 = vector.load %arg4[%c0_4, %c0_5] : memref<32x32xbf16, #tpu.memory_space<vmem>>, vector<32x32xbf16>
    %cst = arith.constant dense<0.000000e+00> : vector<8x32xf32>
    %7 = tpu.matmul %5, %6, %cst {dimension_numbers = #tpu.dot_dimension_numbers<[1], [0], [0], [1], [0, 0, 1, 1], [], []>} : vector<8x32xbf16>, vector<32x32xbf16>, vector<8x32xf32> -> vector<8x32xf32>
    %8 = arith.addf %3, %7 : vector<8x32xf32>
    %c0_6 = arith.constant 0 : index
    %c0_7 = arith.constant 0 : index
    %9 = vector.load %arg6[%c0_6, %c0_7] : memref<8x32xf32, #tpu.memory_space<vmem>>, vector<8x32xf32>
    tpu.vector_store %arg6[%c0_6, %c0_7], %8 {strides = array<i32>} : memref<8x32xf32, #tpu.memory_space<vmem>>, vector<8x32xf32>,
    %c0_i32_8 = arith.constant 0 : i32
    %10 = arith.cmpi eq, %arg2, %c0_i32_8 : i32
    %11 = arith.extui %10 : i1 to i32
    %c0_i32_9 = arith.constant 0 : i32
    %12 = arith.cmpi ne, %11, %c0_i32_9 : i32
    scf.if %12 {
      %c0_10 = arith.constant 0 : index
      %c0_11 = arith.constant 0 : index
      %13 = vector.load %arg6[%c0_10, %c0_11] : memref<8x32xf32, #tpu.memory_space<vmem>>, vector<8x32xf32>
      %14 = arith.truncf %13 : vector<8x32xf32> to vector<8x32xbf16>
      %c0_12 = arith.constant 0 : index
      %c0_13 = arith.constant 0 : index
      %15 = vector.load %arg5[%c0_12, %c0_13] : memref<8x32xbf16, #tpu.memory_space<vmem>>, vector<8x32xbf16>
      tpu.vector_store %arg5[%c0_12, %c0_13], %14 {strides = array<i32>} : memref<8x32xbf16, #tpu.memory_space<vmem>>, vector<8x32xbf16>,
    } else {
    }
    return
  }
  func.func @transform_0(%arg0: i32, %arg1: i32, %arg2: i32) -> (i32, i32) {
    %c0_i32 = arith.constant 0 : i32
    return %arg0, %arg2 : i32, i32
  }
  func.func @transform_1(%arg0: i32, %arg1: i32, %arg2: i32) -> (i32, i32) {
    %c0_i32 = arith.constant 0 : i32
    return %arg2, %arg1 : i32, i32
  }
  func.func @transform_2(%arg0: i32, %arg1: i32, %arg2: i32) -> (i32, i32) {
    %c0_i32 = arith.constant 0 : i32
    return %arg0, %arg1 : i32, i32
  }
}

module attributes {stable_mosaic.version = 11 : i64} {
  func.func @_mm_acc_kernel(%arg0: i32, %arg1: i32, %arg2: i32, %arg3: memref<16x32xf32, #tpu.memory_space<vmem>>, %arg4: memref<1x32x32xbf16, #tpu.memory_space<vmem>>, %arg5: memref<1x16x32xbf16, #tpu.memory_space<vmem>>, %arg6: memref<16x32xf32, #tpu.memory_space<vmem>>) attributes {dimension_semantics = [#tpu.dimension_semantics<parallel>, #tpu.dimension_semantics<parallel>, #tpu.dimension_semantics<arbitrary>], iteration_bounds = array<i64: 3, 1, 1>, scalar_prefetch = 0 : i64, scratch_operands = 1 : i64, tpu.core_type = #tpu.core_type<tc>, window_params = [{transform_indices = @transform_0, window_bounds = array<i64: 16, 32>}, {transform_indices = @transform_1, window_bounds = array<i64: 1, 32, 32>}, {transform_indices = @transform_2, window_bounds = array<i64: 1, 16, 32>}]} {
    %c0_i32 = arith.constant 0 : i32
    %0 = arith.cmpi eq, %arg2, %c0_i32 : i32
    %1 = arith.extui %0 : i1 to i32
    %c0_i32_0 = arith.constant 0 : i32
    %2 = arith.cmpi ne, %1, %c0_i32_0 : i32
    scf.if %2 {
      %cst_11 = arith.constant 0.000000e+00 : f32
      %14 = vector.broadcast %cst_11 : f32 to vector<16x32xf32>
      %c0_12 = arith.constant 0 : index
      %c0_13 = arith.constant 0 : index
      %15 = vector.load %arg6[%c0_12, %c0_13] : memref<16x32xf32, #tpu.memory_space<vmem>>, vector<16x32xf32>
      tpu.vector_store %arg6[%c0_12, %c0_13], %14 {strides = array<i32>} : memref<16x32xf32, #tpu.memory_space<vmem>>, vector<16x32xf32>,
    } else {
    }
    %c0 = arith.constant 0 : index
    %c0_1 = arith.constant 0 : index
    %3 = vector.load %arg6[%c0, %c0_1] : memref<16x32xf32, #tpu.memory_space<vmem>>, vector<16x32xf32>
    %c0_2 = arith.constant 0 : index
    %c0_3 = arith.constant 0 : index
    %4 = vector.load %arg3[%c0_2, %c0_3] : memref<16x32xf32, #tpu.memory_space<vmem>>, vector<16x32xf32>
    %5 = arith.truncf %4 : vector<16x32xf32> to vector<16x32xbf16>
    %c0_4 = arith.constant 0 : index
    %c0_5 = arith.constant 0 : index
    %c0_6 = arith.constant 0 : index
    %6 = vector.load %arg4[%c0_4, %c0_5, %c0_6] : memref<1x32x32xbf16, #tpu.memory_space<vmem>>, vector<1x32x32xbf16>
    %7 = vector.shape_cast %6 : vector<1x32x32xbf16> to vector<32x32xbf16>
    %cst = arith.constant dense<0.000000e+00> : vector<16x32xf32>
    %8 = tpu.matmul %5, %7, %cst {dimension_numbers = #tpu.dot_dimension_numbers<[1], [0], [0], [1], [0, 0, 1, 1], [], []>} : vector<16x32xbf16>, vector<32x32xbf16>, vector<16x32xf32> -> vector<16x32xf32>
    %9 = arith.addf %3, %8 : vector<16x32xf32>
    %c0_7 = arith.constant 0 : index
    %c0_8 = arith.constant 0 : index
    %10 = vector.load %arg6[%c0_7, %c0_8] : memref<16x32xf32, #tpu.memory_space<vmem>>, vector<16x32xf32>
    tpu.vector_store %arg6[%c0_7, %c0_8], %9 {strides = array<i32>} : memref<16x32xf32, #tpu.memory_space<vmem>>, vector<16x32xf32>,
    %c0_i32_9 = arith.constant 0 : i32
    %11 = arith.cmpi eq, %arg2, %c0_i32_9 : i32
    %12 = arith.extui %11 : i1 to i32
    %c0_i32_10 = arith.constant 0 : i32
    %13 = arith.cmpi ne, %12, %c0_i32_10 : i32
    scf.if %13 {
      %c0_11 = arith.constant 0 : index
      %c0_12 = arith.constant 0 : index
      %14 = vector.load %arg6[%c0_11, %c0_12] : memref<16x32xf32, #tpu.memory_space<vmem>>, vector<16x32xf32>
      %15 = arith.truncf %14 : vector<16x32xf32> to vector<16x32xbf16>
      %c0_13 = arith.constant 0 : index
      %c0_14 = arith.constant 0 : index
      %c0_15 = arith.constant 0 : index
      %16 = vector.load %arg5[%c0_13, %c0_14, %c0_15] : memref<1x16x32xbf16, #tpu.memory_space<vmem>>, vector<1x16x32xbf16>
      %17 = vector.shape_cast %16 : vector<1x16x32xbf16> to vector<16x32xbf16>
      %18 = vector.shape_cast %15 : vector<16x32xbf16> to vector<1x16x32xbf16>
      tpu.vector_store %arg5[%c0_13, %c0_14, %c0_15], %18 {strides = array<i32>} : memref<1x16x32xbf16, #tpu.memory_space<vmem>>, vector<1x16x32xbf16>,
    } else {
    }
    return
  }
  func.func @transform_0(%arg0: i32, %arg1: i32, %arg2: i32) -> (i32, i32) {
    %c0_i32 = arith.constant 0 : i32
    return %arg1, %arg2 : i32, i32
  }
  func.func @transform_1(%arg0: i32, %arg1: i32, %arg2: i32) -> (i32, i32, i32) {
    %c0_i32 = arith.constant 0 : i32
    %c0_i32_0 = arith.constant 0 : i32
    return %arg0, %arg2, %c0_i32 : i32, i32, i32
  }
  func.func @transform_2(%arg0: i32, %arg1: i32, %arg2: i32) -> (i32, i32, i32) {
    %c0_i32 = arith.constant 0 : i32
    %c0_i32_0 = arith.constant 0 : i32
    return %arg0, %arg1, %c0_i32 : i32, i32, i32
  }
}

module attributes {stable_mosaic.version = 11 : i64} {
  func.func @_attn_kernel(%arg0: i32, %arg1: i32, %arg2: memref<1x8x32xbf16, #tpu.memory_space<vmem>>, %arg3: memref<1x8x32xbf16, #tpu.memory_space<vmem>>, %arg4: memref<1x8x32xbf16, #tpu.memory_space<vmem>>, %arg5: memref<8x32xbf16, #tpu.memory_space<vmem>>, %arg6: memref<1x32xf32, #tpu.memory_space<vmem>>, %arg7: memref<1x32xf32, #tpu.memory_space<vmem>>, %arg8: memref<8x8xf32, #tpu.memory_space<vmem>>, %arg9: memref<32x32xbf16, #tpu.memory_space<vmem>>, %arg10: memref<1x8x32xf32, #tpu.memory_space<vmem>>, %arg11: memref<1x32xf32, #tpu.memory_space<vmem>>, %arg12: memref<1x32xf32, #tpu.memory_space<vmem>>, %arg13: memref<1x8x32xf32, #tpu.memory_space<vmem>>) attributes {dimension_semantics = [#tpu.dimension_semantics<parallel>, #tpu.dimension_semantics<parallel>], iteration_bounds = array<i64: 2, 1>, scalar_prefetch = 0 : i64, scratch_operands = 0 : i64, tpu.core_type = #tpu.core_type<tc>, window_params = [{transform_indices = @transform_0, window_bounds = array<i64: 1, 8, 32>}, {transform_indices = @transform_1, window_bounds = array<i64: 1, 8, 32>}, {transform_indices = @transform_2, window_bounds = array<i64: 1, 8, 32>}, {pipeline_mode = #tpu.pipeline_mode<synchronous>, transform_indices = @transform_3, window_bounds = array<i64: 8, 32>}, {pipeline_mode = #tpu.pipeline_mode<synchronous>, transform_indices = @transform_4, window_bounds = array<i64: 1, 32>}, {pipeline_mode = #tpu.pipeline_mode<synchronous>, transform_indices = @transform_5, window_bounds = array<i64: 1, 32>}, {transform_indices = @transform_6, window_bounds = array<i64: 8, 8>}, {pipeline_mode = #tpu.pipeline_mode<synchronous>, transform_indices = @transform_7, window_bounds = array<i64: 32, 32>}, {transform_indices = @transform_8, window_bounds = array<i64: 1, 8, 32>}, {pipeline_mode = #tpu.pipeline_mode<synchronous>, transform_indices = @transform_9, window_bounds = array<i64: 1, 32>}, {pipeline_mode = #tpu.pipeline_mode<synchronous>, transform_indices = @transform_10, window_bounds = array<i64: 1, 32>}, {transform_indices = @transform_11, window_bounds = array<i64: 1, 8, 32>}]} {
    %c8_i32 = arith.constant 8 : i32
    %0 = arith.muli %arg1, %c8_i32 : i32
    %c0 = arith.constant 0 : index
    %c0_0 = arith.constant 0 : index
    %1 = vector.load %arg8[%c0, %c0_0] : memref<8x8xf32, #tpu.memory_space<vmem>>, vector<8x8xf32>
    %cst = arith.constant 5.000000e-01 : f32
    %2 = vector.broadcast %cst : f32 to vector<8x8xf32>
    %3 = arith.cmpf ogt, %1, %2 : vector<8x8xf32>
    %4 = tpu.iota {dimensions = array<i32: 0>} : vector<8x8xi32>
    %5 = vector.broadcast %0 : i32 to vector<8x8xi32>
    %6 = arith.addi %4, %5 : vector<8x8xi32>
    %c1_i32 = arith.constant 1 : i32
    %7 = vector.broadcast %c1_i32 : i32 to vector<8x8xi32>
    %8 = arith.addi %6, %7 : vector<8x8xi32>
    %c8_i32_1 = arith.constant 8 : i32
    %9 = vector.broadcast %c8_i32_1 : i32 to vector<8x8xi32>
    %10 = arith.cmpi eq, %8, %9 : vector<8x8xi32>
    %c1_i32_2 = arith.constant 1 : i32
    %11 = vector.broadcast %c1_i32_2 : i32 to vector<8x8xi32>
    %12 = arith.addi %6, %11 : vector<8x8xi32>
    %c0_i32 = arith.constant 0 : i32
    %13 = vector.broadcast %c0_i32 : i32 to vector<8x8xi32>
    %14 = arith.select %10, %13, %12 : vector<8x8xi1>, vector<8x8xi32>
    %c1_i32_3 = arith.constant 1 : i32
    %15 = vector.broadcast %c1_i32_3 : i32 to vector<8x8xi32>
    %16 = arith.andi %14, %15 : vector<8x8xi32>
    %c0_i32_4 = arith.constant 0 : i32
    %17 = vector.broadcast %c0_i32_4 : i32 to vector<8x8xi32>
    %18 = arith.cmpi ne, %16, %17 : vector<8x8xi32>
    %c2_i32 = arith.constant 2 : i32
    %19 = vector.broadcast %c2_i32 : i32 to vector<8x8xi32>
    %20 = arith.andi %14, %19 : vector<8x8xi32>
    %c0_i32_5 = arith.constant 0 : i32
    %21 = vector.broadcast %c0_i32_5 : i32 to vector<8x8xi32>
    %22 = arith.cmpi ne, %20, %21 : vector<8x8xi32>
    %c4_i32 = arith.constant 4 : i32
    %23 = vector.broadcast %c4_i32 : i32 to vector<8x8xi32>
    %24 = arith.andi %14, %23 : vector<8x8xi32>
    %c0_i32_6 = arith.constant 0 : i32
    %25 = vector.broadcast %c0_i32_6 : i32 to vector<8x8xi32>
    %26 = arith.cmpi ne, %24, %25 : vector<8x8xi32>
    %c0_7 = arith.constant 0 : index
    %c0_8 = arith.constant 0 : index
    %c0_9 = arith.constant 0 : index
    %27 = vector.load %arg2[%c0_7, %c0_8, %c0_9] : memref<1x8x32xbf16, #tpu.memory_space<vmem>>, vector<1x8x16xbf16>
    %28 = vector.shape_cast %27 : vector<1x8x16xbf16> to vector<8x16xbf16>
    %29 = arith.extf %28 : vector<8x16xbf16> to vector<8x16xf32>
    %c0_10 = arith.constant 0 : index
    %c0_11 = arith.constant 0 : index
    %30 = vector.load %arg6[%c0_10, %c0_11] : memref<1x32xf32, #tpu.memory_space<vmem>>, vector<1x16xf32>
    %31 = vector.broadcast %30 : vector<1x16xf32> to vector<8x16xf32>
    %32 = arith.addf %29, %31 : vector<8x16xf32>
    %cst_12 = arith.constant 2.500000e-01 : f32
    %33 = vector.broadcast %cst_12 : f32 to vector<8x16xf32>
    %34 = arith.mulf %32, %33 : vector<8x16xf32>
    %35 = arith.truncf %34 : vector<8x16xf32> to vector<8x16xbf16>
    %c0_13 = arith.constant 0 : index
    %c0_14 = arith.constant 0 : index
    %36 = vector.load %arg7[%c0_13, %c0_14] : memref<1x32xf32, #tpu.memory_space<vmem>>, vector<1x16xf32>
    %37 = vector.broadcast %36 : vector<1x16xf32> to vector<8x16xf32>
    %38 = arith.addf %29, %37 : vector<8x16xf32>
    %cst_15 = arith.constant 2.500000e-01 : f32
    %39 = vector.broadcast %cst_15 : f32 to vector<8x16xf32>
    %40 = arith.mulf %38, %39 : vector<8x16xf32>
    %41 = arith.truncf %40 : vector<8x16xf32> to vector<8x16xbf16>
    %c0_16 = arith.constant 0 : index
    %c0_17 = arith.constant 0 : index
    %c0_18 = arith.constant 0 : index
    %42 = vector.load %arg3[%c0_16, %c0_17, %c0_18] : memref<1x8x32xbf16, #tpu.memory_space<vmem>>, vector<1x8x16xbf16>
    %43 = vector.shape_cast %42 : vector<1x8x16xbf16> to vector<8x16xbf16>
    %cst_19 = arith.constant dense<0.000000e+00> : vector<8x8xf32>
    %44 = tpu.matmul %35, %43, %cst_19 {dimension_numbers = #tpu.dot_dimension_numbers<[1], [1], [0], [0], [0, 0, 1, 0], [], []>} : vector<8x16xbf16>, vector<8x16xbf16>, vector<8x8xf32> -> vector<8x8xf32>
    %c0_20 = arith.constant 0 : index
    %c0_21 = arith.constant 0 : index
    %45 = vector.load %arg5[%c0_20, %c0_21] : memref<8x32xbf16, #tpu.memory_space<vmem>>, vector<8x16xbf16>
    %cst_22 = arith.constant dense<0.000000e+00> : vector<8x8xf32>
    %46 = tpu.matmul %41, %45, %cst_22 {dimension_numbers = #tpu.dot_dimension_numbers<[1], [1], [0], [0], [0, 0, 1, 0], [], []>} : vector<8x16xbf16>, vector<8x16xbf16>, vector<8x8xf32> -> vector<8x8xf32>
    %47 = vector.extract_strided_slice %46 {offsets = [0, 7], sizes = [8, 1], strides = [1, 1]} : vector<8x8xf32> to vector<8x1xf32>
    %48 = vector.extract_strided_slice %46 {offsets = [0, 0], sizes = [8, 7], strides = [1, 1]} : vector<8x8xf32> to vector<8x7xf32>
    %49 = tpu.concatenate %47, %48 in 1 : vector<8x1xf32>, vector<8x7xf32> -> vector<8x8xf32>
    %50 = arith.select %18, %49, %46 : vector<8x8xi1>, vector<8x8xf32>
    %51 = vector.extract_strided_slice %50 {offsets = [0, 6], sizes = [8, 2], strides = [1, 1]} : vector<8x8xf32> to vector<8x2xf32>
    %52 = vector.extract_strided_slice %50 {offsets = [0, 0], sizes = [8, 6], strides = [1, 1]} : vector<8x8xf32> to vector<8x6xf32>
    %53 = tpu.concatenate %51, %52 in 1 : vector<8x2xf32>, vector<8x6xf32> -> vector<8x8xf32>
    %54 = arith.select %22, %53, %50 : vector<8x8xi1>, vector<8x8xf32>
    %55 = vector.extract_strided_slice %54 {offsets = [0, 4], sizes = [8, 4], strides = [1, 1]} : vector<8x8xf32> to vector<8x4xf32>
    %56 = vector.extract_strided_slice %54 {offsets = [0, 0], sizes = [8, 4], strides = [1, 1]} : vector<8x8xf32> to vector<8x4xf32>
    %57 = tpu.concatenate %55, %56 in 1 : vector<8x4xf32>, vector<8x4xf32> -> vector<8x8xf32>
    %58 = arith.select %26, %57, %54 : vector<8x8xi1>, vector<8x8xf32>
    %59 = arith.addf %44, %58 : vector<8x8xf32>
    %cst_23 = arith.constant -1.000000e+30 : f32
    %60 = vector.broadcast %cst_23 : f32 to vector<8x8xf32>
    %61 = arith.select %3, %60, %59 : vector<8x8xi1>, vector<8x8xf32>
    %cst_24 = arith.constant dense<0xFF800000> : vector<8xf32>
    %62 = vector.multi_reduction <maximumf>, %61, %cst_24 [1] : vector<8x8xf32> to vector<8xf32>
    %63 = vector.shape_cast %62 : vector<8xf32> to vector<8x1xf32>
    %64 = vector.broadcast %63 : vector<8x1xf32> to vector<8x8xf32>
    %65 = arith.subf %61, %64 : vector<8x8xf32>
    %66 = math.exp %65 : vector<8x8xf32>
    %cst_25 = arith.constant dense<0.000000e+00> : vector<8xf32>
    %67 = vector.multi_reduction <add>, %66, %cst_25 [1] : vector<8x8xf32> to vector<8xf32>
    %68 = vector.shape_cast %67 : vector<8xf32> to vector<8x1xf32>
    %69 = tpu.reciprocal %68 {approx = true} : vector<8x1xf32> -> vector<8x1xf32>
    %70 = vector.broadcast %69 : vector<8x1xf32> to vector<8x8xf32>
    %71 = arith.mulf %66, %70 : vector<8x8xf32>
    %72 = arith.truncf %71 : vector<8x8xf32> to vector<8x8xbf16>
    %c0_26 = arith.constant 0 : index
    %c0_27 = arith.constant 0 : index
    %c0_28 = arith.constant 0 : index
    %73 = vector.load %arg4[%c0_26, %c0_27, %c0_28] : memref<1x8x32xbf16, #tpu.memory_space<vmem>>, vector<1x8x16xbf16>
    %74 = vector.shape_cast %73 : vector<1x8x16xbf16> to vector<8x16xbf16>
    %cst_29 = arith.constant dense<0.000000e+00> : vector<8x16xf32>
    %75 = tpu.matmul %72, %74, %cst_29 {dimension_numbers = #tpu.dot_dimension_numbers<[1], [0], [0], [1], [0, 0, 1, 1], [], []>} : vector<8x8xbf16>, vector<8x16xbf16>, vector<8x16xf32> -> vector<8x16xf32>
    %c0_30 = arith.constant 0 : index
    %c0_31 = arith.constant 0 : index
    %c16 = arith.constant 16 : index
    %76 = vector.load %arg2[%c0_30, %c0_31, %c16] : memref<1x8x32xbf16, #tpu.memory_space<vmem>>, vector<1x8x16xbf16>
    %77 = vector.shape_cast %76 : vector<1x8x16xbf16> to vector<8x16xbf16>
    %78 = arith.extf %77 : vector<8x16xbf16> to vector<8x16xf32>
    %c0_32 = arith.constant 0 : index
    %c16_33 = arith.constant 16 : index
    %79 = vector.load %arg6[%c0_32, %c16_33] : memref<1x32xf32, #tpu.memory_space<vmem>>, vector<1x16xf32>
    %80 = vector.broadcast %79 : vector<1x16xf32> to vector<8x16xf32>
    %81 = arith.addf %78, %80 : vector<8x16xf32>
    %cst_34 = arith.constant 2.500000e-01 : f32
    %82 = vector.broadcast %cst_34 : f32 to vector<8x16xf32>
    %83 = arith.mulf %81, %82 : vector<8x16xf32>
    %84 = arith.truncf %83 : vector<8x16xf32> to vector<8x16xbf16>
    %c0_35 = arith.constant 0 : index
    %c16_36 = arith.constant 16 : index
    %85 = vector.load %arg7[%c0_35, %c16_36] : memref<1x32xf32, #tpu.memory_space<vmem>>, vector<1x16xf32>
    %86 = vector.broadcast %85 : vector<1x16xf32> to vector<8x16xf32>
    %87 = arith.addf %78, %86 : vector<8x16xf32>
    %cst_37 = arith.constant 2.500000e-01 : f32
    %88 = vector.broadcast %cst_37 : f32 to vector<8x16xf32>
    %89 = arith.mulf %87, %88 : vector<8x16xf32>
    %90 = arith.truncf %89 : vector<8x16xf32> to vector<8x16xbf16>
    %c0_38 = arith.constant 0 : index
    %c0_39 = arith.constant 0 : index
    %c16_40 = arith.constant 16 : index
    %91 = vector.load %arg3[%c0_38, %c0_39, %c16_40] : memref<1x8x32xbf16, #tpu.memory_space<vmem>>, vector<1x8x16xbf16>
    %92 = vector.shape_cast %91 : vector<1x8x16xbf16> to vector<8x16xbf16>
    %cst_41 = arith.constant dense<0.000000e+00> : vector<8x8xf32>
    %93 = tpu.matmul %84, %92, %cst_41 {dimension_numbers = #tpu.dot_dimension_numbers<[1], [1], [0], [0], [0, 0, 1, 0], [], []>} : vector<8x16xbf16>, vector<8x16xbf16>, vector<8x8xf32> -> vector<8x8xf32>
    %c0_42 = arith.constant 0 : index
    %c16_43 = arith.constant 16 : index
    %94 = vector.load %arg5[%c0_42, %c16_43] : memref<8x32xbf16, #tpu.memory_space<vmem>>, vector<8x16xbf16>
    %cst_44 = arith.constant dense<0.000000e+00> : vector<8x8xf32>
    %95 = tpu.matmul %90, %94, %cst_44 {dimension_numbers = #tpu.dot_dimension_numbers<[1], [1], [0], [0], [0, 0, 1, 0], [], []>} : vector<8x16xbf16>, vector<8x16xbf16>, vector<8x8xf32> -> vector<8x8xf32>
    %96 = vector.extract_strided_slice %95 {offsets = [0, 7], sizes = [8, 1], strides = [1, 1]} : vector<8x8xf32> to vector<8x1xf32>
    %97 = vector.extract_strided_slice %95 {offsets = [0, 0], sizes = [8, 7], strides = [1, 1]} : vector<8x8xf32> to vector<8x7xf32>
    %98 = tpu.concatenate %96, %97 in 1 : vector<8x1xf32>, vector<8x7xf32> -> vector<8x8xf32>
    %99 = arith.select %18, %98, %95 : vector<8x8xi1>, vector<8x8xf32>
    %100 = vector.extract_strided_slice %99 {offsets = [0, 6], sizes = [8, 2], strides = [1, 1]} : vector<8x8xf32> to vector<8x2xf32>
    %101 = vector.extract_strided_slice %99 {offsets = [0, 0], sizes = [8, 6], strides = [1, 1]} : vector<8x8xf32> to vector<8x6xf32>
    %102 = tpu.concatenate %100, %101 in 1 : vector<8x2xf32>, vector<8x6xf32> -> vector<8x8xf32>
    %103 = arith.select %22, %102, %99 : vector<8x8xi1>, vector<8x8xf32>
    %104 = vector.extract_strided_slice %103 {offsets = [0, 4], sizes = [8, 4], strides = [1, 1]} : vector<8x8xf32> to vector<8x4xf32>
    %105 = vector.extract_strided_slice %103 {offsets = [0, 0], sizes = [8, 4], strides = [1, 1]} : vector<8x8xf32> to vector<8x4xf32>
    %106 = tpu.concatenate %104, %105 in 1 : vector<8x4xf32>, vector<8x4xf32> -> vector<8x8xf32>
    %107 = arith.select %26, %106, %103 : vector<8x8xi1>, vector<8x8xf32>
    %108 = arith.addf %93, %107 : vector<8x8xf32>
    %cst_45 = arith.constant -1.000000e+30 : f32
    %109 = vector.broadcast %cst_45 : f32 to vector<8x8xf32>
    %110 = arith.select %3, %109, %108 : vector<8x8xi1>, vector<8x8xf32>
    %cst_46 = arith.constant dense<0xFF800000> : vector<8xf32>
    %111 = vector.multi_reduction <maximumf>, %110, %cst_46 [1] : vector<8x8xf32> to vector<8xf32>
    %112 = vector.shape_cast %111 : vector<8xf32> to vector<8x1xf32>
    %113 = vector.broadcast %112 : vector<8x1xf32> to vector<8x8xf32>
    %114 = arith.subf %110, %113 : vector<8x8xf32>
    %115 = math.exp %114 : vector<8x8xf32>
    %cst_47 = arith.constant dense<0.000000e+00> : vector<8xf32>
    %116 = vector.multi_reduction <add>, %115, %cst_47 [1] : vector<8x8xf32> to vector<8xf32>
    %117 = vector.shape_cast %116 : vector<8xf32> to vector<8x1xf32>
    %118 = tpu.reciprocal %117 {approx = true} : vector<8x1xf32> -> vector<8x1xf32>
    %119 = vector.broadcast %118 : vector<8x1xf32> to vector<8x8xf32>
    %120 = arith.mulf %115, %119 : vector<8x8xf32>
    %121 = arith.truncf %120 : vector<8x8xf32> to vector<8x8xbf16>
    %c0_48 = arith.constant 0 : index
    %c0_49 = arith.constant 0 : index
    %c16_50 = arith.constant 16 : index
    %122 = vector.load %arg4[%c0_48, %c0_49, %c16_50] : memref<1x8x32xbf16, #tpu.memory_space<vmem>>, vector<1x8x16xbf16>
    %123 = vector.shape_cast %122 : vector<1x8x16xbf16> to vector<8x16xbf16>
    %cst_51 = arith.constant dense<0.000000e+00> : vector<8x16xf32>
    %124 = tpu.matmul %121, %123, %cst_51 {dimension_numbers = #tpu.dot_dimension_numbers<[1], [0], [0], [1], [0, 0, 1, 1], [], []>} : vector<8x8xbf16>, vector<8x16xbf16>, vector<8x16xf32> -> vector<8x16xf32>
    %125 = tpu.concatenate %75, %124 in 1 : vector<8x16xf32>, vector<8x16xf32> -> vector<8x32xf32>
    %126 = arith.truncf %125 : vector<8x32xf32> to vector<8x32xbf16>
    %c0_52 = arith.constant 0 : index
    %c0_53 = arith.constant 0 : index
    %127 = vector.load %arg9[%c0_52, %c0_53] : memref<32x32xbf16, #tpu.memory_space<vmem>>, vector<32x32xbf16>
    %cst_54 = arith.constant dense<0.000000e+00> : vector<8x32xf32>
    %128 = tpu.matmul %126, %127, %cst_54 {dimension_numbers = #tpu.dot_dimension_numbers<[1], [0], [0], [1], [0, 0, 1, 1], [], []>} : vector<8x32xbf16>, vector<32x32xbf16>, vector<8x32xf32> -> vector<8x32xf32>
    %c0_55 = arith.constant 0 : index
    %c0_56 = arith.constant 0 : index
    %c0_57 = arith.constant 0 : index
    %129 = vector.load %arg10[%c0_55, %c0_56, %c0_57] : memref<1x8x32xf32, #tpu.memory_space<vmem>>, vector<1x8x32xf32>
    %130 = vector.shape_cast %129 : vector<1x8x32xf32> to vector<8x32xf32>
    %131 = arith.addf %130, %128 : vector<8x32xf32>
    %cst_58 = arith.constant dense<0.000000e+00> : vector<8xf32>
    %132 = vector.multi_reduction <add>, %131, %cst_58 [1] : vector<8x32xf32> to vector<8xf32>
    %133 = vector.shape_cast %132 : vector<8xf32> to vector<8x1xf32>
    %cst_59 = arith.constant 3.200000e+01 : f32
    %134 = vector.broadcast %cst_59 : f32 to vector<8x1xf32>
    %135 = arith.divf %133, %134 : vector<8x1xf32>
    %136 = vector.broadcast %135 : vector<8x1xf32> to vector<8x32xf32>
    %137 = arith.subf %131, %136 : vector<8x32xf32>
    %138 = arith.mulf %137, %137 : vector<8x32xf32>
    %cst_60 = arith.constant dense<0.000000e+00> : vector<8xf32>
    %139 = vector.multi_reduction <add>, %138, %cst_60 [1] : vector<8x32xf32> to vector<8xf32>
    %140 = vector.shape_cast %139 : vector<8xf32> to vector<8x1xf32>
    %cst_61 = arith.constant 3.200000e+01 : f32
    %141 = vector.broadcast %cst_61 : f32 to vector<8x1xf32>
    %142 = arith.divf %140, %141 : vector<8x1xf32>
    %143 = vector.broadcast %135 : vector<8x1xf32> to vector<8x32xf32>
    %144 = arith.subf %131, %143 : vector<8x32xf32>
    %cst_62 = arith.constant 9.99999974E-6 : f32
    %145 = vector.broadcast %cst_62 : f32 to vector<8x1xf32>
    %146 = arith.addf %142, %145 : vector<8x1xf32>
    %147 = math.rsqrt %146 : vector<8x1xf32>
    %148 = vector.broadcast %147 : vector<8x1xf32> to vector<8x32xf32>
    %149 = arith.mulf %144, %148 : vector<8x32xf32>
    %c0_63 = arith.constant 0 : index
    %c0_64 = arith.constant 0 : index
    %150 = vector.load %arg11[%c0_63, %c0_64] : memref<1x32xf32, #tpu.memory_space<vmem>>, vector<1x32xf32>
    %151 = vector.broadcast %150 : vector<1x32xf32> to vector<8x32xf32>
    %152 = arith.mulf %149, %151 : vector<8x32xf32>
    %c0_65 = arith.constant 0 : index
    %c0_66 = arith.constant 0 : index
    %153 = vector.load %arg12[%c0_65, %c0_66] : memref<1x32xf32, #tpu.memory_space<vmem>>, vector<1x32xf32>
    %154 = vector.broadcast %153 : vector<1x32xf32> to vector<8x32xf32>
    %155 = arith.addf %152, %154 : vector<8x32xf32>
    %c0_67 = arith.constant 0 : index
    %c0_68 = arith.constant 0 : index
    %c0_69 = arith.constant 0 : index
    %156 = vector.load %arg13[%c0_67, %c0_68, %c0_69] : memref<1x8x32xf32, #tpu.memory_space<vmem>>, vector<1x8x32xf32>
    %157 = vector.shape_cast %156 : vector<1x8x32xf32> to vector<8x32xf32>
    %158 = vector.shape_cast %155 : vector<8x32xf32> to vector<1x8x32xf32>
    tpu.vector_store %arg13[%c0_67, %c0_68, %c0_69], %158 {strides = array<i32>} : memref<1x8x32xf32, #tpu.memory_space<vmem>>, vector<1x8x32xf32>,
    return
  }
  func.func @transform_0(%arg0: i32, %arg1: i32) -> (i32, i32, i32) {
    %c0_i32 = arith.constant 0 : i32
    %c0_i32_0 = arith.constant 0 : i32
    return %arg0, %arg1, %c0_i32 : i32, i32, i32
  }
  func.func @transform_1(%arg0: i32, %arg1: i32) -> (i32, i32, i32) {
    %c0_i32 = arith.constant 0 : i32
    %c0_i32_0 = arith.constant 0 : i32
    %c0_i32_1 = arith.constant 0 : i32
    return %arg0, %c0_i32, %c0_i32_0 : i32, i32, i32
  }
  func.func @transform_2(%arg0: i32, %arg1: i32) -> (i32, i32, i32) {
    %c0_i32 = arith.constant 0 : i32
    %c0_i32_0 = arith.constant 0 : i32
    %c0_i32_1 = arith.constant 0 : i32
    return %arg0, %c0_i32, %c0_i32_0 : i32, i32, i32
  }
  func.func @transform_3(%arg0: i32, %arg1: i32) -> (i32, i32) {
    %c0_i32 = arith.constant 0 : i32
    %c0_i32_0 = arith.constant 0 : i32
    %c0_i32_1 = arith.constant 0 : i32
    return %c0_i32, %c0_i32_0 : i32, i32
  }
  func.func @transform_4(%arg0: i32, %arg1: i32) -> (i32, i32) {
    %c0_i32 = arith.constant 0 : i32
    %c0_i32_0 = arith.constant 0 : i32
    %c0_i32_1 = arith.constant 0 : i32
    return %c0_i32, %c0_i32_0 : i32, i32
  }
  func.func @transform_5(%arg0: i32, %arg1: i32) -> (i32, i32) {
    %c0_i32 = arith.constant 0 : i32
    %c0_i32_0 = arith.constant 0 : i32
    %c0_i32_1 = arith.constant 0 : i32
    return %c0_i32, %c0_i32_0 : i32, i32
  }
  func.func @transform_6(%arg0: i32, %arg1: i32) -> (i32, i32) {
    %c0_i32 = arith.constant 0 : i32
    %c0_i32_0 = arith.constant 0 : i32
    return %arg1, %c0_i32 : i32, i32
  }
  func.func @transform_7(%arg0: i32, %arg1: i32) -> (i32, i32) {
    %c0_i32 = arith.constant 0 : i32
    %c0_i32_0 = arith.constant 0 : i32
    %c0_i32_1 = arith.constant 0 : i32
    return %c0_i32, %c0_i32_0 : i32, i32
  }
  func.func @transform_8(%arg0: i32, %arg1: i32) -> (i32, i32, i32) {
    %c0_i32 = arith.constant 0 : i32
    %c0_i32_0 = arith.constant 0 : i32
    return %arg0, %arg1, %c0_i32 : i32, i32, i32
  }
  func.func @transform_9(%arg0: i32, %arg1: i32) -> (i32, i32) {
    %c0_i32 = arith.constant 0 : i32
    %c0_i32_0 = arith.constant 0 : i32
    %c0_i32_1 = arith.constant 0 : i32
    return %c0_i32, %c0_i32_0 : i32, i32
  }
  func.func @transform_10(%arg0: i32, %arg1: i32) -> (i32, i32) {
    %c0_i32 = arith.constant 0 : i32
    %c0_i32_0 = arith.constant 0 : i32
    %c0_i32_1 = arith.constant 0 : i32
    return %c0_i32, %c0_i32_0 : i32, i32
  }
  func.func @transform_11(%arg0: i32, %arg1: i32) -> (i32, i32, i32) {
    %c0_i32 = arith.constant 0 : i32
    %c0_i32_0 = arith.constant 0 : i32
    return %arg0, %arg1, %c0_i32 : i32, i32, i32
  }
}

module attributes {stable_mosaic.version = 11 : i64} {
  func.func @_ff_kernel(%arg0: i32, %arg1: memref<16x32xf32, #tpu.memory_space<vmem>>, %arg2: memref<32x64xbf16, #tpu.memory_space<vmem>>, %arg3: memref<1x64xf32, #tpu.memory_space<vmem>>, %arg4: memref<64x32xbf16, #tpu.memory_space<vmem>>, %arg5: memref<1x32xf32, #tpu.memory_space<vmem>>, %arg6: memref<1x32xf32, #tpu.memory_space<vmem>>, %arg7: memref<1x32xf32, #tpu.memory_space<vmem>>, %arg8: memref<16x32xf32, #tpu.memory_space<vmem>>) attributes {dimension_semantics = [#tpu.dimension_semantics<parallel>], iteration_bounds = array<i64: 1>, scalar_prefetch = 0 : i64, scratch_operands = 0 : i64, tpu.core_type = #tpu.core_type<tc>, window_params = [{transform_indices = @transform_0, window_bounds = array<i64: 16, 32>}, {pipeline_mode = #tpu.pipeline_mode<synchronous>, transform_indices = @transform_1, window_bounds = array<i64: 32, 64>}, {pipeline_mode = #tpu.pipeline_mode<synchronous>, transform_indices = @transform_2, window_bounds = array<i64: 1, 64>}, {pipeline_mode = #tpu.pipeline_mode<synchronous>, transform_indices = @transform_3, window_bounds = array<i64: 64, 32>}, {pipeline_mode = #tpu.pipeline_mode<synchronous>, transform_indices = @transform_4, window_bounds = array<i64: 1, 32>}, {pipeline_mode = #tpu.pipeline_mode<synchronous>, transform_indices = @transform_5, window_bounds = array<i64: 1, 32>}, {pipeline_mode = #tpu.pipeline_mode<synchronous>, transform_indices = @transform_6, window_bounds = array<i64: 1, 32>}, {transform_indices = @transform_7, window_bounds = array<i64: 16, 32>}]} {
    %c0 = arith.constant 0 : index
    %c0_0 = arith.constant 0 : index
    %0 = vector.load %arg1[%c0, %c0_0] : memref<16x32xf32, #tpu.memory_space<vmem>>, vector<16x32xf32>
    %1 = arith.truncf %0 : vector<16x32xf32> to vector<16x32xbf16>
    %c0_1 = arith.constant 0 : index
    %c0_2 = arith.constant 0 : index
    %2 = vector.load %arg2[%c0_1, %c0_2] : memref<32x64xbf16, #tpu.memory_space<vmem>>, vector<32x64xbf16>
    %cst = arith.constant dense<0.000000e+00> : vector<16x64xf32>
    %3 = tpu.matmul %1, %2, %cst {dimension_numbers = #tpu.dot_dimension_numbers<[1], [0], [0], [1], [0, 0, 1, 1], [], []>} : vector<16x32xbf16>, vector<32x64xbf16>, vector<16x64xf32> -> vector<16x64xf32>
    %c0_3 = arith.constant 0 : index
    %c0_4 = arith.constant 0 : index
    %4 = vector.load %arg3[%c0_3, %c0_4] : memref<1x64xf32, #tpu.memory_space<vmem>>, vector<1x64xf32>
    %5 = vector.broadcast %4 : vector<1x64xf32> to vector<16x64xf32>
    %6 = arith.addf %3, %5 : vector<16x64xf32>
    %cst_5 = arith.constant 0.000000e+00 : f32
    %7 = vector.broadcast %cst_5 : f32 to vector<16x64xf32>
    %8 = arith.maximumf %6, %7 : vector<16x64xf32>
    %9 = arith.truncf %8 : vector<16x64xf32> to vector<16x64xbf16>
    %c0_6 = arith.constant 0 : index
    %c0_7 = arith.constant 0 : index
    %10 = vector.load %arg4[%c0_6, %c0_7] : memref<64x32xbf16, #tpu.memory_space<vmem>>, vector<64x32xbf16>
    %cst_8 = arith.constant dense<0.000000e+00> : vector<16x32xf32>
    %11 = tpu.matmul %9, %10, %cst_8 {dimension_numbers = #tpu.dot_dimension_numbers<[1], [0], [0], [1], [0, 0, 1, 1], [], []>} : vector<16x64xbf16>, vector<64x32xbf16>, vector<16x32xf32> -> vector<16x32xf32>
    %c0_9 = arith.constant 0 : index
    %c0_10 = arith.constant 0 : index
    %12 = vector.load %arg5[%c0_9, %c0_10] : memref<1x32xf32, #tpu.memory_space<vmem>>, vector<1x32xf32>
    %13 = vector.broadcast %12 : vector<1x32xf32> to vector<16x32xf32>
    %14 = arith.addf %11, %13 : vector<16x32xf32>
    %15 = arith.addf %0, %14 : vector<16x32xf32>
    %cst_11 = arith.constant dense<0.000000e+00> : vector<16xf32>
    %16 = vector.multi_reduction <add>, %15, %cst_11 [1] : vector<16x32xf32> to vector<16xf32>
    %17 = vector.shape_cast %16 : vector<16xf32> to vector<16x1xf32>
    %cst_12 = arith.constant 3.200000e+01 : f32
    %18 = vector.broadcast %cst_12 : f32 to vector<16x1xf32>
    %19 = arith.divf %17, %18 : vector<16x1xf32>
    %20 = vector.broadcast %19 : vector<16x1xf32> to vector<16x32xf32>
    %21 = arith.subf %15, %20 : vector<16x32xf32>
    %22 = arith.mulf %21, %21 : vector<16x32xf32>
    %cst_13 = arith.constant dense<0.000000e+00> : vector<16xf32>
    %23 = vector.multi_reduction <add>, %22, %cst_13 [1] : vector<16x32xf32> to vector<16xf32>
    %24 = vector.shape_cast %23 : vector<16xf32> to vector<16x1xf32>
    %cst_14 = arith.constant 3.200000e+01 : f32
    %25 = vector.broadcast %cst_14 : f32 to vector<16x1xf32>
    %26 = arith.divf %24, %25 : vector<16x1xf32>
    %27 = vector.broadcast %19 : vector<16x1xf32> to vector<16x32xf32>
    %28 = arith.subf %15, %27 : vector<16x32xf32>
    %cst_15 = arith.constant 9.99999974E-6 : f32
    %29 = vector.broadcast %cst_15 : f32 to vector<16x1xf32>
    %30 = arith.addf %26, %29 : vector<16x1xf32>
    %31 = math.rsqrt %30 : vector<16x1xf32>
    %32 = vector.broadcast %31 : vector<16x1xf32> to vector<16x32xf32>
    %33 = arith.mulf %28, %32 : vector<16x32xf32>
    %c0_16 = arith.constant 0 : index
    %c0_17 = arith.constant 0 : index
    %34 = vector.load %arg6[%c0_16, %c0_17] : memref<1x32xf32, #tpu.memory_space<vmem>>, vector<1x32xf32>
    %35 = vector.broadcast %34 : vector<1x32xf32> to vector<16x32xf32>
    %36 = arith.mulf %33, %35 : vector<16x32xf32>
    %c0_18 = arith.constant 0 : index
    %c0_19 = arith.constant 0 : index
    %37 = vector.load %arg7[%c0_18, %c0_19] : memref<1x32xf32, #tpu.memory_space<vmem>>, vector<1x32xf32>
    %38 = vector.broadcast %37 : vector<1x32xf32> to vector<16x32xf32>
    %39 = arith.addf %36, %38 : vector<16x32xf32>
    %c0_20 = arith.constant 0 : index
    %c0_21 = arith.constant 0 : index
    %40 = vector.load %arg8[%c0_20, %c0_21] : memref<16x32xf32, #tpu.memory_space<vmem>>, vector<16x32xf32>
    tpu.vector_store %arg8[%c0_20, %c0_21], %39 {strides = array<i32>} : memref<16x32xf32, #tpu.memory_space<vmem>>, vector<16x32xf32>,
    return
  }
  func.func @transform_0(%arg0: i32) -> (i32, i32) {
    %c0_i32 = arith.constant 0 : i32
    %c0_i32_0 = arith.constant 0 : i32
    return %arg0, %c0_i32 : i32, i32
  }
  func.func @transform_1(%arg0: i32) -> (i32, i32) {
    %c0_i32 = arith.constant 0 : i32
    %c0_i32_0 = arith.constant 0 : i32
    %c0_i32_1 = arith.constant 0 : i32
    return %c0_i32, %c0_i32_0 : i32, i32
  }
  func.func @transform_2(%arg0: i32) -> (i32, i32) {
    %c0_i32 = arith.constant 0 : i32
    %c0_i32_0 = arith.constant 0 : i32
    %c0_i32_1 = arith.constant 0 : i32
    return %c0_i32, %c0_i32_0 : i32, i32
  }
  func.func @transform_3(%arg0: i32) -> (i32, i32) {
    %c0_i32 = arith.constant 0 : i32
    %c0_i32_0 = arith.constant 0 : i32
    %c0_i32_1 = arith.constant 0 : i32
    return %c0_i32, %c0_i32_0 : i32, i32
  }
  func.func @transform_4(%arg0: i32) -> (i32, i32) {
    %c0_i32 = arith.constant 0 : i32
    %c0_i32_0 = arith.constant 0 : i32
    %c0_i32_1 = arith.constant 0 : i32
    return %c0_i32, %c0_i32_0 : i32, i32
  }
  func.func @transform_5(%arg0: i32) -> (i32, i32) {
    %c0_i32 = arith.constant 0 : i32
    %c0_i32_0 = arith.constant 0 : i32
    %c0_i32_1 = arith.constant 0 : i32
    return %c0_i32, %c0_i32_0 : i32, i32
  }
  func.func @transform_6(%arg0: i32) -> (i32, i32) {
    %c0_i32 = arith.constant 0 : i32
    %c0_i32_0 = arith.constant 0 : i32
    %c0_i32_1 = arith.constant 0 : i32
    return %c0_i32, %c0_i32_0 : i32, i32
  }
  func.func @transform_7(%arg0: i32) -> (i32, i32) {
    %c0_i32 = arith.constant 0 : i32
    %c0_i32_0 = arith.constant 0 : i32
    return %arg0, %c0_i32 : i32, i32
  }
}

</mosaic_0001>

<llo_original>
// kernel: rel_partial_decoder_layer.5
$region0: #{rel_partial_decoder_layer.5}
  #allocation0 [shape = 'u32[]', space=smem, size = 0x4, offset = 0x4, fixed_abs, tag = 'smem constant byte address 0x4 - core index']
  #allocation1 [shape = 'u32[72,128]{1,0:T(1,128)}', space=vmem, size = 0x9000, scoped, tag = 'internal scratch']
  #allocation2 [shape = 'f32[8,32]{1,0:T(8,128)}', space=vmem, size = 0x1000, scoped, tag = 'scratch operand']
  %s0 = inlined_call_operand.vmem [shape: f32[8,32], index: 0, kind: input, shape index: {}]
  %s1 = inlined_call_operand.vmem [shape: bf16[32,32], index: 1, kind: input, shape index: {}]
  %s2 = inlined_call_operand.vmem [shape: bf16[8,32], index: 2, kind: output, shape index: {}]
  %s3 = sld [smem:[#allocation0]]
  $region26: #{rel_partial_decoder_layer.5} parent=0
    _
  %s5 = ssub.s32 1, %s3
  %s6 = scalar_select 0, %s5, %s3
  // Predicated region
  $region2: #{rel_partial_decoder_layer.5} parent=0 // pred_check
    _
  $region3: #{rel_partial_decoder_layer.5} parent=0 // pred_check_branch
    %8 = sbr.rel (0) target = $region5
  $region4: #{rel_partial_decoder_layer.5} parent=0 // pred_region
    _
  $region5: #{rel_partial_decoder_layer.5} parent=0 // pred_fallthru
    _
  // Predicated region
  $region6: #{rel_partial_decoder_layer.5} parent=0 // pred_check
    _
  $region7: #{rel_partial_decoder_layer.5} parent=0 // pred_check_branch
    %10 = sbr.rel (0) target = $region9
  $region8: #{rel_partial_decoder_layer.5} parent=0 // pred_region
    _
  $region9: #{rel_partial_decoder_layer.5} parent=0 // pred_fallthru
    _
  %p12 = scmp.eq.s32.totalorder 0, 0
  // Predicated region
  $region10: #{rel_partial_decoder_layer.5} parent=0 // pred_check
    %p13 = pneg %p12
  $region11: #{rel_partial_decoder_layer.5} parent=0 // pred_check_branch
    %15 = sbr.rel (%p13) target = $region13
  $region12: #{rel_partial_decoder_layer.5} parent=0 // pred_region
    %vm16 = vcmask 261120
    %17 = vst.msk [vmem:[#allocation2] sm:$0xff] %vm16, 0.0
  $region13: #{rel_partial_decoder_layer.5} parent=0 // pred_fallthru
    _
  %v18 = vld [vmem:[#allocation2] sm:$0xff]
  %v19 = vld [vmem:[%s0] sm:$0xff]
  %v20 = vpack.c.bf16 %v19, %v19
  %v21 = vld [vmem:[%s1] sm:$0xf]
  %v22 = vld [vmem:[%s1 + $0x4] sm:$0xf]
  %v23 = vld [vmem:[%s1 + $0x8] sm:$0xf]
  %v24 = vld [vmem:[%s1 + $0xc] sm:$0xf]
  %v29 = vunpack.c.l.b16 %v21
  %v30 = vunpack.c.l.b16 %v22
  %v31 = vunpack.c.l.b16 %v23
  %v32 = vunpack.c.l.b16 %v24
  %v33 = vpack.c.b16 %v30, %v29
  %v34 = vpack.c.b16 %v32, %v31
  %vm37 = vcmask 261120
  %v39 = vsel %vm37, %v20, 0
  %41 = vmatpush.bf16.msra.mxu0 0
  %42 = vmatpush.bf16.msra.mxu0 0
  %43 = vmatpush.bf16.msra.mxu0 0
  %44 = vmatpush.bf16.msra.mxu0 0
  %45 = vmatpush.bf16.msra.mxu0 0
  %46 = vmatpush.bf16.msra.mxu0 0
  %47 = vmatpush.bf16.msra.mxu0 %v34
  %48 = vmatpush.bf16.msra.mxu0 %v33
  %49 = vmatmul.bf16.gmra.mxu0 %v39
  %v50 = vpop.f32.mrf.mxu0
  %v51 = vadd.f32 0.0, %v50
  %v52 = vpop.f32.mrf.mxu0
  %53 = vdwg.mxu0
  %v54 = vadd.f32 %v18, %v51
  %55 = vst.msk [vmem:[#allocation2] sm:$0xff] %vm37, %v54
  // Predicated region
  $region14: #{rel_partial_decoder_layer.5} parent=0 // pred_check
    %p56 = pneg %p12
  $region15: #{rel_partial_decoder_layer.5} parent=0 // pred_check_branch
    %58 = sbr.rel (%p56) target = $region17
  $region16: #{rel_partial_decoder_layer.5} parent=0 // pred_region
    %v59 = vld [vmem:[#allocation2] sm:$0xff]
    %v60 = vpack.c.bf16 %v59, %v59
    %vm61 = vcmask 257024
    %62 = vst.msk [vmem:[%s2] sm:$0xf] %vm61, %v60
  $region17: #{rel_partial_decoder_layer.5} parent=0 // pred_fallthru
    _
  // Predicated region
  $region18: #{rel_partial_decoder_layer.5} parent=0 // pred_check
    _
  $region19: #{rel_partial_decoder_layer.5} parent=0 // pred_check_branch
    %64 = sbr.rel (0) target = $region21
  $region20: #{rel_partial_decoder_layer.5} parent=0 // pred_region
    _
  $region21: #{rel_partial_decoder_layer.5} parent=0 // pred_fallthru
    _
  // Predicated region
  $region22: #{rel_partial_decoder_layer.5} parent=0 // pred_check
    _
  $region23: #{rel_partial_decoder_layer.5} parent=0 // pred_check_branch
    %66 = sbr.rel (0) target = $region25
  $region24: #{rel_partial_decoder_layer.5} parent=0 // pred_region
    _
  $region25: #{rel_partial_decoder_layer.5} parent=0 // pred_fallthru
    _

// kernel: rel_partial_decoder_layer.7
$region0: #{rel_partial_decoder_layer.7}
  #allocation0 [shape = 'u32[]', space=smem, size = 0x4, offset = 0x4, fixed_abs, tag = 'smem constant byte address 0x4 - core index']
  #allocation1 [shape = 'u32[72,128]{1,0:T(1,128)}', space=vmem, size = 0x9000, scoped, tag = 'internal scratch']
  %s0 = inlined_call_operand.vmem [shape: f32[16,32], index: 0, kind: input, shape index: {}]
  %s1 = inlined_call_operand.vmem [shape: bf16[32,64], index: 1, kind: input, shape index: {}]
  %s2 = inlined_call_operand.vmem [shape: f32[1,64], index: 2, kind: input, shape index: {}]
  %s3 = inlined_call_operand.vmem [shape: bf16[64,32], index: 3, kind: input, shape index: {}]
  %s4 = inlined_call_operand.vmem [shape: f32[1,32], index: 4, kind: input, shape index: {}]
  %s5 = inlined_call_operand.vmem [shape: f32[1,32], index: 5, kind: input, shape index: {}]
  %s6 = inlined_call_operand.vmem [shape: f32[1,32], index: 6, kind: input, shape index: {}]
  %s7 = inlined_call_operand.vmem [shape: f32[16,32], index: 7, kind: output, shape index: {}]
  %s8 = sld [smem:[#allocation0]]
  $region38: #{rel_partial_decoder_layer.7} parent=0
    _
  %s10 = ssub.s32 1, %s8
  %s11 = scalar_select 0, %s10, %s8
  // Predicated region
  $region2: #{rel_partial_decoder_layer.7} parent=0 // pred_check
    _
  $region3: #{rel_partial_decoder_layer.7} parent=0 // pred_check_branch
    %13 = sbr.rel (0) target = $region5
  $region4: #{rel_partial_decoder_layer.7} parent=0 // pred_region
    _
  $region5: #{rel_partial_decoder_layer.7} parent=0 // pred_fallthru
    _
  // Predicated region
  $region6: #{rel_partial_decoder_layer.7} parent=0 // pred_check
    _
  $region7: #{rel_partial_decoder_layer.7} parent=0 // pred_check_branch
    %15 = sbr.rel (0) target = $region9
  $region8: #{rel_partial_decoder_layer.7} parent=0 // pred_region
    _
  $region9: #{rel_partial_decoder_layer.7} parent=0 // pred_fallthru
    _
  // Predicated region
  $region10: #{rel_partial_decoder_layer.7} parent=0 // pred_check
    _
  $region11: #{rel_partial_decoder_layer.7} parent=0 // pred_check_branch
    %17 = sbr.rel (0) target = $region13
  $region12: #{rel_partial_decoder_layer.7} parent=0 // pred_region
    _
  $region13: #{rel_partial_decoder_layer.7} parent=0 // pred_fallthru
    _
  // Predicated region
  $region14: #{rel_partial_decoder_layer.7} parent=0 // pred_check
    _
  $region15: #{rel_partial_decoder_layer.7} parent=0 // pred_check_branch
    %19 = sbr.rel (0) target = $region17
  $region16: #{rel_partial_decoder_layer.7} parent=0 // pred_region
    _
  $region17: #{rel_partial_decoder_layer.7} parent=0 // pred_fallthru
    _
  // Predicated region
  $region18: #{rel_partial_decoder_layer.7} parent=0 // pred_check
    _
  $region19: #{rel_partial_decoder_layer.7} parent=0 // pred_check_branch
    %21 = sbr.rel (0) target = $region21
  $region20: #{rel_partial_decoder_layer.7} parent=0 // pred_region
    _
  $region21: #{rel_partial_decoder_layer.7} parent=0 // pred_fallthru
    _
  // Predicated region
  $region22: #{rel_partial_decoder_layer.7} parent=0 // pred_check
    _
  $region23: #{rel_partial_decoder_layer.7} parent=0 // pred_check_branch
    %23 = sbr.rel (0) target = $region25
  $region24: #{rel_partial_decoder_layer.7} parent=0 // pred_region
    _
  $region25: #{rel_partial_decoder_layer.7} parent=0 // pred_fallthru
    _
  // Predicated region
  $region26: #{rel_partial_decoder_layer.7} parent=0 // pred_check
    _
  $region27: #{rel_partial_decoder_layer.7} parent=0 // pred_check_branch
    %25 = sbr.rel (0) target = $region29
  $region28: #{rel_partial_decoder_layer.7} parent=0 // pred_region
    _
  $region29: #{rel_partial_decoder_layer.7} parent=0 // pred_fallthru
    _
  %v27 = vld [vmem:[%s0] sm:$0xff]
  %v28 = vld [vmem:[%s0 + $0x8] sm:$0xff]
  %v29 = vpack.c.bf16 %v28, %v27
  %v30 = vld [vmem:[%s1] sm:$0xf]
  %v31 = vld [vmem:[%s1 + $0x4] sm:$0xf]
  %v32 = vld [vmem:[%s1 + $0x8] sm:$0xf]
  %v33 = vld [vmem:[%s1 + $0xc] sm:$0xf]
  %v34 = vld [vmem:[%s2] sm:$0x1]
  %v36 = vperm.slane %v34, 0
  %v42 = vunpack.c.l.b16 %v30
  %v43 = vunpack.c.l.b16 %v31
  %v44 = vunpack.c.l.b16 %v32
  %v45 = vunpack.c.l.b16 %v33
  %v46 = vpack.c.b16 %v43, %v42
  %v47 = vpack.c.b16 %v45, %v44
  %vm50 = vcmask 261120
  %v52 = vsel %vm50, %v29, 0
  %54 = vmatpush.bf16.msra.mxu0 0
  %55 = vmatpush.bf16.msra.mxu0 0
  %56 = vmatpush.bf16.msra.mxu0 0
  %57 = vmatpush.bf16.msra.mxu0 0
  %58 = vmatpush.bf16.msra.mxu0 0
  %59 = vmatpush.bf16.msra.mxu0 0
  %60 = vmatpush.bf16.msra.mxu0 %v47
  %61 = vmatpush.bf16.msra.mxu0 %v46
  %62 = vmatmul.bf16.gmra.mxu0 %v52
  %v63 = vpop.f32.mrf.mxu0
  %v64 = vadd.f32 %v36, %v63
  %v65 = vpop.f32.mrf.mxu0
  %v66 = vadd.f32 %v36, %v65
  %67 = vdwg.mxu0
  %v68 = vmax.f32 %v64, 0.0
  %v69 = vmax.f32 %v66, 0.0
  %v70 = vpack.c.bf16 %v69, %v68
  %v71 = vld [vmem:[%s3] sm:$0xf]
  %v72 = vld [vmem:[%s3 + $0x4] sm:$0xf]
  %v73 = vld [vmem:[%s3 + $0x8] sm:$0xf]
  %v74 = vld [vmem:[%s3 + $0xc] sm:$0xf]
  %v75 = vld [vmem:[%s3 + $0x10] sm:$0xf]
  %v76 = vld [vmem:[%s3 + $0x14] sm:$0xf]
  %v77 = vld [vmem:[%s3 + $0x18] sm:$0xf]
  %v78 = vld [vmem:[%s3 + $0x1c] sm:$0xf]
  %v79 = vld [vmem:[%s4] sm:$0x1]
  %v81 = vperm.slane %v79, 0
  %v91 = vunpack.c.l.b16 %v71
  %v92 = vunpack.c.l.b16 %v72
  %v93 = vunpack.c.l.b16 %v73
  %v94 = vunpack.c.l.b16 %v74
  %v95 = vunpack.c.l.b16 %v75
  %v96 = vunpack.c.l.b16 %v76
  %v97 = vunpack.c.l.b16 %v77
  %v98 = vunpack.c.l.b16 %v78
  %v99 = vpack.c.b16 %v92, %v91
  %v100 = vpack.c.b16 %v94, %v93
  %v101 = vpack.c.b16 %v96, %v95
  %v102 = vpack.c.b16 %v98, %v97
  %vm107 = vcmask 523264
  %v109 = vsel %vm107, %v70, 0
  %111 = vmatpush.bf16.msra.mxu0 0
  %112 = vmatpush.bf16.msra.mxu0 0
  %113 = vmatpush.bf16.msra.mxu0 0
  %114 = vmatpush.bf16.msra.mxu0 0
  %115 = vmatpush.bf16.msra.mxu0 %v102
  %116 = vmatpush.bf16.msra.mxu0 %v101
  %117 = vmatpush.bf16.msra.mxu0 %v100
  %118 = vmatpush.bf16.msra.mxu0 %v99
  %119 = vmatmul.bf16.gmra.mxu0 %v109
  %v120 = vpop.f32.mrf.mxu0
  %v121 = vadd.f32 %v81, %v120
  %v122 = vpop.f32.mrf.mxu0
  %v123 = vadd.f32 %v81, %v122
  %124 = vdwg.mxu0
  %v125 = vadd.f32 %v27, %v121
  %v126 = vadd.f32 %v28, %v123
  %v127 = vsel %vm50, %v125, 0.0
  %128 = vadd.xlane.f32.xlu0 %v127
  %v129 = vpop.xlane.xlu0 %128
  %v130 = vsel %vm50, %v126, 0.0
  %131 = vadd.xlane.f32.xlu0 %v130
  %v132 = vpop.xlane.xlu0 %131
  %v133 = vrcp.pop 32.0
  %v134 = vmul.f32 32.0, %v133
  %v135 = vsub.f32 1.0, %v134
  %v136 = vmul.f32 %v133, %v135
  %v137 = vadd.f32 %v133, %v136
  %vm138 = vweird.f32 %v133
  %v139 = vsel %vm138, %v133, %v137
  %v140 = vmul.f32 %v129, %v139
  %v141 = vmul.f32 %v132, %v139
  %v142 = vsub.f32 %v125, %v140
  %v143 = vsub.f32 %v126, %v141
  %v144 = vmul.f32 %v142, %v142
  %v145 = vmul.f32 %v143, %v143
  %v146 = vsel %vm50, %v144, 0.0
  %147 = vadd.xlane.f32.xlu0 %v146
  %v148 = vpop.xlane.xlu0 %147
  %v149 = vsel %vm50, %v145, 0.0
  %150 = vadd.xlane.f32.xlu0 %v149
  %v151 = vpop.xlane.xlu0 %150
  %v152 = vmul.f32 %v148, %v139
  %v153 = vmul.f32 %v151, %v139
  %v154 = vadd.f32 %v152, 1e-05
  %v155 = vadd.f32 %v153, 1e-05
  %v156 = vrsqrt.pop %v154
  %v157 = vmul.f32 %v156, %v154
  %v158 = vmul.f32 %v157, %v156
  %v159 = vmul.f32 0.5, %v158
  %v160 = vsub.f32 1.5, %v159
  %v161 = vmul.f32 %v156, %v160
  %vm162 = vweird.f32 %v154
  %vm163 = vweird.f32 %v156
  %vm164 = vmor %vm162, %vm163
  %v165 = vsel %vm164, %v156, %v161
  %v166 = vrsqrt.pop %v155
  %v167 = vmul.f32 %v166, %v155
  %v168 = vmul.f32 %v167, %v166
  %v169 = vmul.f32 0.5, %v168
  %v170 = vsub.f32 1.5, %v169
  %v171 = vmul.f32 %v166, %v170
  %vm172 = vweird.f32 %v155
  %vm173 = vweird.f32 %v166
  %vm174 = vmor %vm172, %vm173
  %v175 = vsel %vm174, %v166, %v171
  %v176 = vmul.f32 %v142, %v165
  %v177 = vmul.f32 %v143, %v175
  %v178 = vld [vmem:[%s5] sm:$0x1]
  %v180 = vperm.slane %v178, 0
  %v182 = vmul.f32 %v176, %v180
  %v183 = vmul.f32 %v177, %v180
  %v184 = vld [vmem:[%s6] sm:$0x1]
  %v186 = vperm.slane %v184, 0
  %v188 = vadd.f32 %v182, %v186
  %v189 = vadd.f32 %v183, %v186
  %190 = vst.msk [vmem:[%s7] sm:$0xff] %vm50, %v188
  %191 = vst.msk [vmem:[%s7 + $0x8] sm:$0xff] %vm50, %v189
  // Predicated region
  $region30: #{rel_partial_decoder_layer.7} parent=0 // pred_check
    _
  $region31: #{rel_partial_decoder_layer.7} parent=0 // pred_check_branch
    %193 = sbr.rel (0) target = $region33
  $region32: #{rel_partial_decoder_layer.7} parent=0 // pred_region
    _
  $region33: #{rel_partial_decoder_layer.7} parent=0 // pred_fallthru
    _
  // Predicated region
  $region34: #{rel_partial_decoder_layer.7} parent=0 // pred_check
    _
  $region35: #{rel_partial_decoder_layer.7} parent=0 // pred_check_branch
    %195 = sbr.rel (0) target = $region37
  $region36: #{rel_partial_decoder_layer.7} parent=0 // pred_region
    _
  $region37: #{rel_partial_decoder_layer.7} parent=0 // pred_fallthru
    _

// kernel: rel_partial_decoder_layer.4
$region0: #{rel_partial_decoder_layer.4}
  #allocation0 [shape = 'u32[]', space=smem, size = 0x4, offset = 0x4, fixed_abs, tag = 'smem constant byte address 0x4 - core index']
  #allocation1 [shape = 'u32[72,128]{1,0:T(1,128)}', space=vmem, size = 0x9000, scoped, tag = 'internal scratch']
  #allocation2 [shape = 'f32[16,32]{1,0:T(8,128)}', space=vmem, size = 0x2000, scoped, tag = 'scratch operand']
  %s0 = inlined_call_operand.vmem [shape: f32[16,32], index: 0, kind: input, shape index: {}]
  %s1 = inlined_call_operand.vmem [shape: bf16[3,32,32], index: 1, kind: input, shape index: {}]
  %s2 = inlined_call_operand.vmem [shape: bf16[3,16,32], index: 2, kind: output, shape index: {}]
  %s3 = sld [smem:[#allocation0]]
  $region49: #{rel_partial_decoder_layer.4} parent=0
    _
  %s5 = ssub.s32 1, %s3
  %s6 = scalar_select 0, %s5, %s3
  loop: start=0, step=1, limit=5
  $region2: #{rel_partial_decoder_layer.4} parent=0 // loop_pre_header
    _
  $region3: #{rel_partial_decoder_layer.4} parent=0 // loop_header
    %s8 = sphi 0, %s12
    %p9 = scmp.ge.s32.totalorder %s8, 5
    %s15 = sphi 0, %s34
    %s16 = sphi 0, %s30
    %s17 = sphi 0, %s26
    %s18 = sphi 0, %s15
    %s19 = sphi 0, %s16
    %s20 = sphi 0, %s17
    %s21 = sphi 0, %s18
    %s22 = sphi 0, %s19
    %s23 = sphi 0, %s20
    %s39 = sphi 0, %s41
    %s42 = sphi 0, %s39
    %s43 = sphi 0, %s42
    %s59 = sphi 0, %s43
    %s67 = sphi 0, %s69
    %s70 = sphi 0, %s67
    %s71 = sphi 0, %s70
    %s87 = sphi 0, %s71
    %s95 = sphi 0, %s97
    %s98 = sphi 0, %s95
    %s99 = sphi 0, %s98
    %s115 = sphi 0, %s99
  $region4: #{rel_partial_decoder_layer.4} parent=0 // loop_header_branch
    %11 = sbr.rel (%p9) target = $region8
  $region5: #{rel_partial_decoder_layer.4} parent=0 // loop_body
    %s13 = ssub.s32 %s8, 1
    %s14 = ssub.s32 %s8, 2
    %s24 = sadd.s32 1, %s17
    %p25 = scmp.ge.s32.totalorder %s24, 1
    %s26 = scalar_select %p25, 0, %s24
    %s27 = sadd.s32 1, %s16
    %s28 = scalar_select %p25, %s27, %s16
    %p29 = scmp.ge.s32.totalorder %s28, 1
    %s30 = scalar_select %p29, 0, %s28
    %s31 = sadd.s32 1, %s15
    %s32 = scalar_select %p29, %s31, %s15
    %p33 = scmp.ge.s32.totalorder %s32, 3
    %s34 = scalar_select %p33, 0, %s32
    %s35 = ssub.s32 %s16, %s30
    %s36 = ssub.s32 %s17, %s26
    %s37 = sor.u32 %s35, %s36
    %p38 = scmp.eq.s32.totalorder %s37, 0
    %s40 = sadd.s32 %s39, 1
    %s41 = scalar_select %p38, %s39, %s40
    %p44 = pneg %p38
    %p45 = scmp.eq.s32.totalorder %s8, 2
    %p46 = por %p44, %p45
    %p47 = scmp.ne.s32.totalorder %s39, %s42
    %p48 = scmp.eq.s32.totalorder %s8, 0
    %p49 = por %p47, %p48
    %p50 = scmp.ne.s32.totalorder %s39, %s42
    %p51 = scmp.eq.s32.totalorder %s13, 2
    %p52 = por %p50, %p51
    %p53 = scmp.ne.s32.totalorder %s42, %s43
    %p54 = scmp.eq.s32.totalorder %s13, 0
    %p55 = por %p53, %p54
    %p56 = scmp.ne.s32.totalorder %s42, %s43
    %p57 = scmp.eq.s32.totalorder %s14, 2
    %p58 = por %p56, %p57
    %p60 = scmp.ne.s32.totalorder %s43, %s59
    %p61 = scmp.eq.s32.totalorder %s14, 0
    %p62 = por %p60, %p61
    %s63 = ssub.s32 %s15, %s34
    %s64 = ssub.s32 %s17, %s26
    %s65 = sor.u32 %s63, %s64
    %p66 = scmp.eq.s32.totalorder %s65, 0
    %s68 = sadd.s32 %s67, 1
    %s69 = scalar_select %p66, %s67, %s68
    %p72 = pneg %p66
    %p73 = scmp.eq.s32.totalorder %s8, 2
    %p74 = por %p72, %p73
    %p75 = scmp.ne.s32.totalorder %s67, %s70
    %p76 = scmp.eq.s32.totalorder %s8, 0
    %p77 = por %p75, %p76
    %p78 = scmp.ne.s32.totalorder %s67, %s70
    %p79 = scmp.eq.s32.totalorder %s13, 2
    %p80 = por %p78, %p79
    %p81 = scmp.ne.s32.totalorder %s70, %s71
    %p82 = scmp.eq.s32.totalorder %s13, 0
    %p83 = por %p81, %p82
    %p84 = scmp.ne.s32.totalorder %s70, %s71
    %p85 = scmp.eq.s32.totalorder %s14, 2
    %p86 = por %p84, %p85
    %p88 = scmp.ne.s32.totalorder %s71, %s87
    %p89 = scmp.eq.s32.totalorder %s14, 0
    %p90 = por %p88, %p89
    %s91 = ssub.s32 %s15, %s34
    %s92 = ssub.s32 %s16, %s30
    %s93 = sor.u32 %s91, %s92
    %p94 = scmp.eq.s32.totalorder %s93, 0
    %s96 = sadd.s32 %s95, 1
    %s97 = scalar_select %p94, %s95, %s96
    %p100 = pneg %p94
    %p101 = scmp.eq.s32.totalorder %s8, 2
    %p102 = por %p100, %p101
    %p103 = scmp.ne.s32.totalorder %s95, %s98
    %p104 = scmp.eq.s32.totalorder %s8, 0
    %p105 = por %p103, %p104
    %p106 = scmp.ne.s32.totalorder %s95, %s98
    %p107 = scmp.eq.s32.totalorder %s13, 2
    %p108 = por %p106, %p107
    %p109 = scmp.ne.s32.totalorder %s98, %s99
    %p110 = scmp.eq.s32.totalorder %s13, 0
    %p111 = por %p109, %p110
    %p112 = scmp.ne.s32.totalorder %s98, %s99
    %p113 = scmp.eq.s32.totalorder %s14, 2
    %p114 = por %p112, %p113
    %p116 = scmp.ne.s32.totalorder %s99, %s115
    %p117 = scmp.eq.s32.totalorder %s14, 0
    %p118 = por %p116, %p117
    %p119 = scmp.le.s32.totalorder 1, %s8
    %p120 = scmp.lt.s32.totalorder %s8, 4
    %p121 = pnand %p119, %p120
    %p122 = pneg %p121
    // Predicated region
    $region9: #{rel_partial_decoder_layer.4} parent=5 // pred_check
      _
    $region10: #{rel_partial_decoder_layer.4} parent=5 // pred_check_branch
      %124 = sbr.rel (%p121) target = $region12
    $region11: #{rel_partial_decoder_layer.4} parent=5 // pred_region
      %s125 = ssub.s32 %s8, 1
      // Predicated region
      $region13: #{rel_partial_decoder_layer.4} parent=11 // pred_check
        %p126 = pneg %p55
      $region14: #{rel_partial_decoder_layer.4} parent=11 // pred_check_branch
        %128 = sbr.rel (%p126) target = $region16
      $region15: #{rel_partial_decoder_layer.4} parent=11 // pred_region
        %s129 = smul.u32 2, %s19
        %p130 = scmp.lt.s32.totalorder %s129, 1
        %s131 = scalar_select %p130, %s129, 1
        %p132 = scmp.lt.s32.totalorder %s20, 0
        %s133 = scalar_select %p132, %s20, 0
        %s134 = sadd.s32 %s133, %s131
        %s135 = smul.addr %s134, 8
        %s136 = scalar_lea.vmem %s0, %s135
        %s137 = smul.u32 2, %s19
      $region16: #{rel_partial_decoder_layer.4} parent=11 // pred_fallthru
        _
    $region12: #{rel_partial_decoder_layer.4} parent=5 // pred_fallthru
      _
    %p138 = scmp.lt.s32.totalorder %s8, 3
    // Predicated region
    $region17: #{rel_partial_decoder_layer.4} parent=5 // pred_check
      %p139 = pneg %p138
    $region18: #{rel_partial_decoder_layer.4} parent=5 // pred_check_branch
      %141 = sbr.rel (%p139) target = $region20
    $region19: #{rel_partial_decoder_layer.4} parent=5 // pred_region
      // Predicated region
      $region21: #{rel_partial_decoder_layer.4} parent=19 // pred_check
        %p142 = pneg %p77
      $region22: #{rel_partial_decoder_layer.4} parent=19 // pred_check_branch
        %144 = sbr.rel (%p142) target = $region24
      $region23: #{rel_partial_decoder_layer.4} parent=19 // pred_region
        %s145 = smul.u32 4, %s17
        %p146 = scmp.lt.s32.totalorder %s15, 2
        %s147 = scalar_select %p146, %s15, 2
        %p148 = scmp.lt.s32.totalorder %s145, 3
        %s149 = scalar_select %p148, %s145, 3
        %s150 = smul.addr %s147, 4
        %s151 = sadd.s32 %s149, %s150
        %s152 = smul.addr %s151, 4
        %s153 = scalar_lea.vmem %s1, %s152
        %s154 = smul.u32 4, %s17
      $region24: #{rel_partial_decoder_layer.4} parent=19 // pred_fallthru
        _
    $region20: #{rel_partial_decoder_layer.4} parent=5 // pred_fallthru
      _
    %p155 = scmp.le.s32.totalorder 1, %s8
    %p156 = scmp.lt.s32.totalorder %s8, 4
    %p157 = pnand %p155, %p156
    %p158 = pneg %p157
    // Predicated region
    $region25: #{rel_partial_decoder_layer.4} parent=5 // pred_check
      _
    $region26: #{rel_partial_decoder_layer.4} parent=5 // pred_check_branch
      %160 = sbr.rel (%p157) target = $region28
    $region27: #{rel_partial_decoder_layer.4} parent=5 // pred_region
      %s161 = ssub.s32 %s8, 1
      %s162 = smul.u32 2, %s19
      %p163 = scmp.lt.s32.totalorder %s162, 1
      %s164 = scalar_select %p163, %s162, 1
      %p165 = scmp.lt.s32.totalorder %s20, 0
      %s166 = scalar_select %p165, %s20, 0
      %s167 = sadd.s32 %s166, %s164
      %s168 = smul.addr %s167, 8
      %s169 = scalar_lea.vmem %s0, %s168
      %p170 = pneg %p55
      %p171 = pneg %p52
      %s172 = smul.u32 4, %s20
      %p173 = scmp.lt.s32.totalorder %s18, 2
      %s174 = scalar_select %p173, %s18, 2
      %p175 = scmp.lt.s32.totalorder %s172, 3
      %s176 = scalar_select %p175, %s172, 3
      %s177 = smul.addr %s174, 4
      %s178 = sadd.s32 %s176, %s177
      %s179 = smul.addr %s178, 4
      %s180 = scalar_lea.vmem %s1, %s179
      %p181 = pneg %p83
      %p182 = pneg %p80
      %p183 = pneg %p111
      %p184 = pneg %p108
      %s185 = smul.u32 2, %s19
      %p186 = scmp.lt.s32.totalorder %s18, 2
      %s187 = scalar_select %p186, %s18, 2
      %p188 = scmp.lt.s32.totalorder %s185, 1
      %s189 = scalar_select %p188, %s185, 1
      %s190 = smul.addr %s187, 2
      %s191 = sadd.s32 %s189, %s190
      %s192 = smul.addr %s191, 4
      %s193 = scalar_lea.vmem %s2, %s192
      %s194 = smul.u32 2, %s19
      %p195 = scmp.lt.s32.totalorder %s194, 1
      %s196 = scalar_select %p195, %s194, 1
      %p197 = scmp.lt.s32.totalorder %s20, 0
      %s198 = scalar_select %p197, %s20, 0
      %s199 = sadd.s32 %s198, %s196
      %s200 = smul.addr %s199, 8
      %s201 = scalar_lea.vmem %s0, %s200
      %s202 = smul.u32 2, %s19
      %s203 = smul.u32 4, %s20
      %p204 = scmp.lt.s32.totalorder %s18, 2
      %s205 = scalar_select %p204, %s18, 2
      %p206 = scmp.lt.s32.totalorder %s203, 3
      %s207 = scalar_select %p206, %s203, 3
      %s208 = smul.addr %s205, 4
      %s209 = sadd.s32 %s207, %s208
      %s210 = smul.addr %s209, 4
      %s211 = scalar_lea.vmem %s1, %s210
      %s212 = smul.u32 4, %s20
      %s213 = smul.u32 2, %s19
      %p214 = scmp.lt.s32.totalorder %s18, 2
      %s215 = scalar_select %p214, %s18, 2
      %p216 = scmp.lt.s32.totalorder %s213, 1
      %s217 = scalar_select %p216, %s213, 1
      %s218 = smul.addr %s215, 2
      %s219 = sadd.s32 %s217, %s218
      %s220 = smul.addr %s219, 4
      %s221 = scalar_lea.vmem %s2, %s220
      %s222 = smul.u32 2, %s19
      %p224 = scmp.eq.s32.totalorder %s20, 0
      // Predicated region
      $region29: #{rel_partial_decoder_layer.4} parent=27 // pred_check
        %p225 = pneg %p224
      $region30: #{rel_partial_decoder_layer.4} parent=27 // pred_check_branch
        %227 = sbr.rel (%p225) target = $region32
      $region31: #{rel_partial_decoder_layer.4} parent=27 // pred_region
        %vm228 = vcmask 261120
        %229 = vst.msk [vmem:[#allocation2] sm:$0xff] %vm228, 0.0
        %230 = vst.msk [vmem:[#allocation2 + $0x8] sm:$0xff] %vm228, 0.0
      $region32: #{rel_partial_decoder_layer.4} parent=27 // pred_fallthru
        _
      %v231 = vld [vmem:[#allocation2] sm:$0xff]
      %v232 = vld [vmem:[#allocation2 + $0x8] sm:$0xff]
      %v233 = vld [vmem:[%s201] sm:$0xff]
      %v234 = vld [vmem:[%s201 + $0x8] sm:$0xff]
      %v235 = vpack.c.bf16 %v234, %v233
      %v236 = vld [vmem:[%s211] sm:$0xf]
      %v237 = vld [vmem:[%s211 + $0x4] sm:$0xf]
      %v238 = vld [vmem:[%s211 + $0x8] sm:$0xf]
      %v239 = vld [vmem:[%s211 + $0xc] sm:$0xf]
      %v244 = vunpack.c.l.b16 %v236
      %v245 = vunpack.c.l.b16 %v237
      %v246 = vunpack.c.l.b16 %v238
      %v247 = vunpack.c.l.b16 %v239
      %v248 = vpack.c.b16 %v245, %v244
      %v249 = vpack.c.b16 %v247, %v246
      %vm252 = vcmask 261120
      %v254 = vsel %vm252, %v235, 0
      %256 = vmatpush.bf16.msra.mxu0 0
      %257 = vmatpush.bf16.msra.mxu0 0
      %258 = vmatpush.bf16.msra.mxu0 0
      %259 = vmatpush.bf16.msra.mxu0 0
      %260 = vmatpush.bf16.msra.mxu0 0
      %261 = vmatpush.bf16.msra.mxu0 0
      %262 = vmatpush.bf16.msra.mxu0 %v249
      %263 = vmatpush.bf16.msra.mxu0 %v248
      %264 = vmatmul.bf16.gmra.mxu0 %v254
      %v265 = vpop.f32.mrf.mxu0
      %v266 = vadd.f32 0.0, %v265
      %v267 = vpop.f32.mrf.mxu0
      %v268 = vadd.f32 0.0, %v267
      %269 = vdwg.mxu0
      %v270 = vadd.f32 %v231, %v266
      %v271 = vadd.f32 %v232, %v268
      %272 = vst.msk [vmem:[#allocation2] sm:$0xff] %vm252, %v270
      %273 = vst.msk [vmem:[#allocation2 + $0x8] sm:$0xff] %vm252, %v271
      // Predicated region
      $region33: #{rel_partial_decoder_layer.4} parent=27 // pred_check
        %p274 = pneg %p224
      $region34: #{rel_partial_decoder_layer.4} parent=27 // pred_check_branch
        %276 = sbr.rel (%p274) target = $region36
      $region35: #{rel_partial_decoder_layer.4} parent=27 // pred_region
        %v277 = vld [vmem:[#allocation2] sm:$0xff]
        %v278 = vld [vmem:[#allocation2 + $0x8] sm:$0xff]
        %v279 = vpack.c.bf16 %v277, %v277
        %v280 = vpack.c.bf16 %v278, %v278
        %vm281 = vcmask 257024
        %282 = vst.msk [vmem:[%s221] sm:$0xf] %vm281, %v279
        %283 = vst.msk [vmem:[%s221 + $0x4] sm:$0xf] %vm281, %v280
      $region36: #{rel_partial_decoder_layer.4} parent=27 // pred_fallthru
        _
      %s284 = smul.u32 2, %s19
      %p285 = scmp.lt.s32.totalorder %s18, 2
      %s286 = scalar_select %p285, %s18, 2
      %p287 = scmp.lt.s32.totalorder %s284, 1
      %s288 = scalar_select %p287, %s284, 1
      %s289 = smul.addr %s286, 2
      %s290 = sadd.s32 %s288, %s289
      %s291 = smul.addr %s290, 4
      %s292 = scalar_lea.vmem %s2, %s291
      // Predicated region
      $region37: #{rel_partial_decoder_layer.4} parent=27 // pred_check
        %p293 = pneg %p108
      $region38: #{rel_partial_decoder_layer.4} parent=27 // pred_check_branch
        %295 = sbr.rel (%p293) target = $region40
      $region39: #{rel_partial_decoder_layer.4} parent=27 // pred_region
        %s296 = smul.u32 2, %s19
      $region40: #{rel_partial_decoder_layer.4} parent=27 // pred_fallthru
        _
    $region28: #{rel_partial_decoder_layer.4} parent=5 // pred_fallthru
      _
    %p297 = scmp.le.s32.totalorder 2, %s8
    // Predicated region
    $region41: #{rel_partial_decoder_layer.4} parent=5 // pred_check
      %p298 = pneg %p297
    $region42: #{rel_partial_decoder_layer.4} parent=5 // pred_check_branch
      %300 = sbr.rel (%p298) target = $region44
    $region43: #{rel_partial_decoder_layer.4} parent=5 // pred_region
      %s301 = ssub.s32 %s8, 2
      // Predicated region
      $region45: #{rel_partial_decoder_layer.4} parent=43 // pred_check
        %p302 = pneg %p114
      $region46: #{rel_partial_decoder_layer.4} parent=43 // pred_check_branch
        %304 = sbr.rel (%p302) target = $region48
      $region47: #{rel_partial_decoder_layer.4} parent=43 // pred_region
        %s305 = smul.u32 2, %s22
        %p306 = scmp.lt.s32.totalorder %s21, 2
        %s307 = scalar_select %p306, %s21, 2
        %p308 = scmp.lt.s32.totalorder %s305, 1
        %s309 = scalar_select %p308, %s305, 1
        %s310 = smul.addr %s307, 2
        %s311 = sadd.s32 %s309, %s310
        %s312 = smul.addr %s311, 4
        %s313 = scalar_lea.vmem %s2, %s312
      $region48: #{rel_partial_decoder_layer.4} parent=43 // pred_fallthru
        _
    $region44: #{rel_partial_decoder_layer.4} parent=5 // pred_fallthru
      _
  $region6: #{rel_partial_decoder_layer.4} parent=0 // loop_footer
    %s12 = sadd.s32 1, %s8
  $region7: #{rel_partial_decoder_layer.4} parent=0 // loop_footer_branch
    %7 = sbr.rel target = $region3
  $region8: #{rel_partial_decoder_layer.4} parent=0 // loop_exit
    _

// kernel: rel_partial_decoder_layer.6
$region0: #{rel_partial_decoder_layer.6}
  #allocation0 [shape = 'u32[]', space=smem, size = 0x4, offset = 0x4, fixed_abs, tag = 'smem constant byte address 0x4 - core index']
  #allocation1 [shape = 'u32[72,128]{1,0:T(1,128)}', space=vmem, size = 0x9000, scoped, tag = 'internal scratch']
  %s0 = inlined_call_operand.vmem [shape: bf16[2,8,32], index: 0, kind: input, shape index: {}]
  %s1 = inlined_call_operand.vmem [shape: bf16[2,8,32], index: 1, kind: input, shape index: {}]
  %s2 = inlined_call_operand.vmem [shape: bf16[2,8,32], index: 2, kind: input, shape index: {}]
  %s3 = inlined_call_operand.vmem [shape: bf16[8,32], index: 3, kind: input, shape index: {}]
  %s4 = inlined_call_operand.vmem [shape: f32[1,32], index: 4, kind: input, shape index: {}]
  %s5 = inlined_call_operand.vmem [shape: f32[1,32], index: 5, kind: input, shape index: {}]
  %s6 = inlined_call_operand.vmem [shape: f32[8,8], index: 6, kind: input, shape index: {}]
  %s7 = inlined_call_operand.vmem [shape: bf16[32,32], index: 7, kind: input, shape index: {}]
  %s8 = inlined_call_operand.vmem [shape: f32[2,8,32], index: 8, kind: input, shape index: {}]
  %s9 = inlined_call_operand.vmem [shape: f32[1,32], index: 9, kind: input, shape index: {}]
  %s10 = inlined_call_operand.vmem [shape: f32[1,32], index: 10, kind: input, shape index: {}]
  %s11 = inlined_call_operand.vmem [shape: f32[2,8,32], index: 11, kind: output, shape index: {}]
  %s12 = sld [smem:[#allocation0]]
  $region77: #{rel_partial_decoder_layer.6} parent=0
    _
  %s14 = ssub.s32 1, %s12
  %s15 = scalar_select 0, %s14, %s12
  loop: start=0, step=1, limit=4
  $region2: #{rel_partial_decoder_layer.6} parent=0 // loop_pre_header
    _
  $region3: #{rel_partial_decoder_layer.6} parent=0 // loop_header
    %s17 = sphi 0, %s21
    %p18 = scmp.ge.s32.totalorder %s17, 4
    %s24 = sphi 0, %s36
    %s25 = sphi 0, %s32
    %s26 = sphi 0, %s24
    %s27 = sphi 0, %s25
    %s28 = sphi 0, %s26
    %s29 = sphi 0, %s27
    %s41 = sphi 0, %s43
    %s44 = sphi 0, %s41
    %s45 = sphi 0, %s44
    %s61 = sphi 0, %s45
    %s67 = sphi 0, %s69
    %s70 = sphi 0, %s67
    %s71 = sphi 0, %s70
    %s87 = sphi 0, %s71
    %s93 = sphi 0, %s95
    %s96 = sphi 0, %s93
    %s97 = sphi 0, %s96
    %s113 = sphi 0, %s97
    %s117 = sphi 0, %s117
    %s119 = sphi 0, %s117
    %s120 = sphi 0, %s119
    %s134 = sphi 0, %s120
    %s138 = sphi 0, %s138
    %s140 = sphi 0, %s138
    %s141 = sphi 0, %s140
    %s155 = sphi 0, %s141
    %s159 = sphi 0, %s159
    %s161 = sphi 0, %s159
    %s162 = sphi 0, %s161
    %s176 = sphi 0, %s162
    %s182 = sphi 0, %s184
    %s185 = sphi 0, %s182
    %s186 = sphi 0, %s185
    %s202 = sphi 0, %s186
    %s206 = sphi 0, %s206
    %s208 = sphi 0, %s206
    %s209 = sphi 0, %s208
    %s223 = sphi 0, %s209
    %s231 = sphi 0, %s233
    %s234 = sphi 0, %s231
    %s235 = sphi 0, %s234
    %s251 = sphi 0, %s235
    %s255 = sphi 0, %s255
    %s257 = sphi 0, %s255
    %s258 = sphi 0, %s257
    %s272 = sphi 0, %s258
    %s276 = sphi 0, %s276
    %s278 = sphi 0, %s276
    %s279 = sphi 0, %s278
    %s293 = sphi 0, %s279
    %s301 = sphi 0, %s303
    %s304 = sphi 0, %s301
    %s305 = sphi 0, %s304
    %s321 = sphi 0, %s305
  $region4: #{rel_partial_decoder_layer.6} parent=0 // loop_header_branch
    %20 = sbr.rel (%p18) target = $region8
  $region5: #{rel_partial_decoder_layer.6} parent=0 // loop_body
    %s22 = ssub.s32 %s17, 1
    %s23 = ssub.s32 %s17, 2
    %s30 = sadd.s32 1, %s25
    %p31 = scmp.ge.s32.totalorder %s30, 1
    %s32 = scalar_select %p31, 0, %s30
    %s33 = sadd.s32 1, %s24
    %s34 = scalar_select %p31, %s33, %s24
    %p35 = scmp.ge.s32.totalorder %s34, 2
    %s36 = scalar_select %p35, 0, %s34
    %s37 = ssub.s32 %s24, %s36
    %s38 = ssub.s32 %s25, %s32
    %s39 = sor.u32 %s37, %s38
    %p40 = scmp.eq.s32.totalorder %s39, 0
    %s42 = sadd.s32 %s41, 1
    %s43 = scalar_select %p40, %s41, %s42
    %p46 = pneg %p40
    %p47 = scmp.eq.s32.totalorder %s17, 1
    %p48 = por %p46, %p47
    %p49 = scmp.ne.s32.totalorder %s41, %s44
    %p50 = scmp.eq.s32.totalorder %s17, 0
    %p51 = por %p49, %p50
    %p52 = scmp.ne.s32.totalorder %s41, %s44
    %p53 = scmp.eq.s32.totalorder %s22, 1
    %p54 = por %p52, %p53
    %p55 = scmp.ne.s32.totalorder %s44, %s45
    %p56 = scmp.eq.s32.totalorder %s22, 0
    %p57 = por %p55, %p56
    %p58 = scmp.ne.s32.totalorder %s44, %s45
    %p59 = scmp.eq.s32.totalorder %s23, 1
    %p60 = por %p58, %p59
    %p62 = scmp.ne.s32.totalorder %s45, %s61
    %p63 = scmp.eq.s32.totalorder %s23, 0
    %p64 = por %p62, %p63
    %s65 = ssub.s32 %s24, %s36
    %p66 = scmp.eq.s32.totalorder %s65, 0
    %s68 = sadd.s32 %s67, 1
    %s69 = scalar_select %p66, %s67, %s68
    %p72 = pneg %p66
    %p73 = scmp.eq.s32.totalorder %s17, 1
    %p74 = por %p72, %p73
    %p75 = scmp.ne.s32.totalorder %s67, %s70
    %p76 = scmp.eq.s32.totalorder %s17, 0
    %p77 = por %p75, %p76
    %p78 = scmp.ne.s32.totalorder %s67, %s70
    %p79 = scmp.eq.s32.totalorder %s22, 1
    %p80 = por %p78, %p79
    %p81 = scmp.ne.s32.totalorder %s70, %s71
    %p82 = scmp.eq.s32.totalorder %s22, 0
    %p83 = por %p81, %p82
    %p84 = scmp.ne.s32.totalorder %s70, %s71
    %p85 = scmp.eq.s32.totalorder %s23, 1
    %p86 = por %p84, %p85
    %p88 = scmp.ne.s32.totalorder %s71, %s87
    %p89 = scmp.eq.s32.totalorder %s23, 0
    %p90 = por %p88, %p89
    %s91 = ssub.s32 %s24, %s36
    %p92 = scmp.eq.s32.totalorder %s91, 0
    %s94 = sadd.s32 %s93, 1
    %s95 = scalar_select %p92, %s93, %s94
    %p98 = pneg %p92
    %p99 = scmp.eq.s32.totalorder %s17, 1
    %p100 = por %p98, %p99
    %p101 = scmp.ne.s32.totalorder %s93, %s96
    %p102 = scmp.eq.s32.totalorder %s17, 0
    %p103 = por %p101, %p102
    %p104 = scmp.ne.s32.totalorder %s93, %s96
    %p105 = scmp.eq.s32.totalorder %s22, 1
    %p106 = por %p104, %p105
    %p107 = scmp.ne.s32.totalorder %s96, %s97
    %p108 = scmp.eq.s32.totalorder %s22, 0
    %p109 = por %p107, %p108
    %p110 = scmp.ne.s32.totalorder %s96, %s97
    %p111 = scmp.eq.s32.totalorder %s23, 1
    %p112 = por %p110, %p111
    %p114 = scmp.ne.s32.totalorder %s97, %s113
    %p115 = scmp.eq.s32.totalorder %s23, 0
    %p116 = por %p114, %p115
    %s118 = sadd.s32 %s117, 1
    %p121 = scmp.eq.s32.totalorder %s17, 1
    %p122 = scmp.ne.s32.totalorder %s117, %s119
    %p123 = scmp.eq.s32.totalorder %s17, 0
    %p124 = por %p122, %p123
    %p125 = scmp.ne.s32.totalorder %s117, %s119
    %p126 = scmp.eq.s32.totalorder %s22, 1
    %p127 = por %p125, %p126
    %p128 = scmp.ne.s32.totalorder %s119, %s120
    %p129 = scmp.eq.s32.totalorder %s22, 0
    %p130 = por %p128, %p129
    %p131 = scmp.ne.s32.totalorder %s119, %s120
    %p132 = scmp.eq.s32.totalorder %s23, 1
    %p133 = por %p131, %p132
    %p135 = scmp.ne.s32.totalorder %s120, %s134
    %p136 = scmp.eq.s32.totalorder %s23, 0
    %p137 = por %p135, %p136
    %s139 = sadd.s32 %s138, 1
    %p142 = scmp.eq.s32.totalorder %s17, 1
    %p143 = scmp.ne.s32.totalorder %s138, %s140
    %p144 = scmp.eq.s32.totalorder %s17, 0
    %p145 = por %p143, %p144
    %p146 = scmp.ne.s32.totalorder %s138, %s140
    %p147 = scmp.eq.s32.totalorder %s22, 1
    %p148 = por %p146, %p147
    %p149 = scmp.ne.s32.totalorder %s140, %s141
    %p150 = scmp.eq.s32.totalorder %s22, 0
    %p151 = por %p149, %p150
    %p152 = scmp.ne.s32.totalorder %s140, %s141
    %p153 = scmp.eq.s32.totalorder %s23, 1
    %p154 = por %p152, %p153
    %p156 = scmp.ne.s32.totalorder %s141, %s155
    %p157 = scmp.eq.s32.totalorder %s23, 0
    %p158 = por %p156, %p157
    %s160 = sadd.s32 %s159, 1
    %p163 = scmp.eq.s32.totalorder %s17, 1
    %p164 = scmp.ne.s32.totalorder %s159, %s161
    %p165 = scmp.eq.s32.totalorder %s17, 0
    %p166 = por %p164, %p165
    %p167 = scmp.ne.s32.totalorder %s159, %s161
    %p168 = scmp.eq.s32.totalorder %s22, 1
    %p169 = por %p167, %p168
    %p170 = scmp.ne.s32.totalorder %s161, %s162
    %p171 = scmp.eq.s32.totalorder %s22, 0
    %p172 = por %p170, %p171
    %p173 = scmp.ne.s32.totalorder %s161, %s162
    %p174 = scmp.eq.s32.totalorder %s23, 1
    %p175 = por %p173, %p174
    %p177 = scmp.ne.s32.totalorder %s162, %s176
    %p178 = scmp.eq.s32.totalorder %s23, 0
    %p179 = por %p177, %p178
    %s180 = ssub.s32 %s25, %s32
    %p181 = scmp.eq.s32.totalorder %s180, 0
    %s183 = sadd.s32 %s182, 1
    %s184 = scalar_select %p181, %s182, %s183
    %p187 = pneg %p181
    %p188 = scmp.eq.s32.totalorder %s17, 1
    %p189 = por %p187, %p188
    %p190 = scmp.ne.s32.totalorder %s182, %s185
    %p191 = scmp.eq.s32.totalorder %s17, 0
    %p192 = por %p190, %p191
    %p193 = scmp.ne.s32.totalorder %s182, %s185
    %p194 = scmp.eq.s32.totalorder %s22, 1
    %p195 = por %p193, %p194
    %p196 = scmp.ne.s32.totalorder %s185, %s186
    %p197 = scmp.eq.s32.totalorder %s22, 0
    %p198 = por %p196, %p197
    %p199 = scmp.ne.s32.totalorder %s185, %s186
    %p200 = scmp.eq.s32.totalorder %s23, 1
    %p201 = por %p199, %p200
    %p203 = scmp.ne.s32.totalorder %s186, %s202
    %p204 = scmp.eq.s32.totalorder %s23, 0
    %p205 = por %p203, %p204
    %s207 = sadd.s32 %s206, 1
    %p210 = scmp.eq.s32.totalorder %s17, 1
    %p211 = scmp.ne.s32.totalorder %s206, %s208
    %p212 = scmp.eq.s32.totalorder %s17, 0
    %p213 = por %p211, %p212
    %p214 = scmp.ne.s32.totalorder %s206, %s208
    %p215 = scmp.eq.s32.totalorder %s22, 1
    %p216 = por %p214, %p215
    %p217 = scmp.ne.s32.totalorder %s208, %s209
    %p218 = scmp.eq.s32.totalorder %s22, 0
    %p219 = por %p217, %p218
    %p220 = scmp.ne.s32.totalorder %s208, %s209
    %p221 = scmp.eq.s32.totalorder %s23, 1
    %p222 = por %p220, %p221
    %p224 = scmp.ne.s32.totalorder %s209, %s223
    %p225 = scmp.eq.s32.totalorder %s23, 0
    %p226 = por %p224, %p225
    %s227 = ssub.s32 %s24, %s36
    %s228 = ssub.s32 %s25, %s32
    %s229 = sor.u32 %s227, %s228
    %p230 = scmp.eq.s32.totalorder %s229, 0
    %s232 = sadd.s32 %s231, 1
    %s233 = scalar_select %p230, %s231, %s232
    %p236 = pneg %p230
    %p237 = scmp.eq.s32.totalorder %s17, 1
    %p238 = por %p236, %p237
    %p239 = scmp.ne.s32.totalorder %s231, %s234
    %p240 = scmp.eq.s32.totalorder %s17, 0
    %p241 = por %p239, %p240
    %p242 = scmp.ne.s32.totalorder %s231, %s234
    %p243 = scmp.eq.s32.totalorder %s22, 1
    %p244 = por %p242, %p243
    %p245 = scmp.ne.s32.totalorder %s234, %s235
    %p246 = scmp.eq.s32.totalorder %s22, 0
    %p247 = por %p245, %p246
    %p248 = scmp.ne.s32.totalorder %s234, %s235
    %p249 = scmp.eq.s32.totalorder %s23, 1
    %p250 = por %p248, %p249
    %p252 = scmp.ne.s32.totalorder %s235, %s251
    %p253 = scmp.eq.s32.totalorder %s23, 0
    %p254 = por %p252, %p253
    %s256 = sadd.s32 %s255, 1
    %p259 = scmp.eq.s32.totalorder %s17, 1
    %p260 = scmp.ne.s32.totalorder %s255, %s257
    %p261 = scmp.eq.s32.totalorder %s17, 0
    %p262 = por %p260, %p261
    %p263 = scmp.ne.s32.totalorder %s255, %s257
    %p264 = scmp.eq.s32.totalorder %s22, 1
    %p265 = por %p263, %p264
    %p266 = scmp.ne.s32.totalorder %s257, %s258
    %p267 = scmp.eq.s32.totalorder %s22, 0
    %p268 = por %p266, %p267
    %p269 = scmp.ne.s32.totalorder %s257, %s258
    %p270 = scmp.eq.s32.totalorder %s23, 1
    %p271 = por %p269, %p270
    %p273 = scmp.ne.s32.totalorder %s258, %s272
    %p274 = scmp.eq.s32.totalorder %s23, 0
    %p275 = por %p273, %p274
    %s277 = sadd.s32 %s276, 1
    %p280 = scmp.eq.s32.totalorder %s17, 1
    %p281 = scmp.ne.s32.totalorder %s276, %s278
    %p282 = scmp.eq.s32.totalorder %s17, 0
    %p283 = por %p281, %p282
    %p284 = scmp.ne.s32.totalorder %s276, %s278
    %p285 = scmp.eq.s32.totalorder %s22, 1
    %p286 = por %p284, %p285
    %p287 = scmp.ne.s32.totalorder %s278, %s279
    %p288 = scmp.eq.s32.totalorder %s22, 0
    %p289 = por %p287, %p288
    %p290 = scmp.ne.s32.totalorder %s278, %s279
    %p291 = scmp.eq.s32.totalorder %s23, 1
    %p292 = por %p290, %p291
    %p294 = scmp.ne.s32.totalorder %s279, %s293
    %p295 = scmp.eq.s32.totalorder %s23, 0
    %p296 = por %p294, %p295
    %s297 = ssub.s32 %s24, %s36
    %s298 = ssub.s32 %s25, %s32
    %s299 = sor.u32 %s297, %s298
    %p300 = scmp.eq.s32.totalorder %s299, 0
    %s302 = sadd.s32 %s301, 1
    %s303 = scalar_select %p300, %s301, %s302
    %p306 = pneg %p300
    %p307 = scmp.eq.s32.totalorder %s17, 1
    %p308 = por %p306, %p307
    %p309 = scmp.ne.s32.totalorder %s301, %s304
    %p310 = scmp.eq.s32.totalorder %s17, 0
    %p311 = por %p309, %p310
    %p312 = scmp.ne.s32.totalorder %s301, %s304
    %p313 = scmp.eq.s32.totalorder %s22, 1
    %p314 = por %p312, %p313
    %p315 = scmp.ne.s32.totalorder %s304, %s305
    %p316 = scmp.eq.s32.totalorder %s22, 0
    %p317 = por %p315, %p316
    %p318 = scmp.ne.s32.totalorder %s304, %s305
    %p319 = scmp.eq.s32.totalorder %s23, 1
    %p320 = por %p318, %p319
    %p322 = scmp.ne.s32.totalorder %s305, %s321
    %p323 = scmp.eq.s32.totalorder %s23, 0
    %p324 = por %p322, %p323
    %p325 = scmp.le.s32.totalorder 1, %s17
    %p326 = scmp.lt.s32.totalorder %s17, 3
    %p327 = pnand %p325, %p326
    %p328 = pneg %p327
    // Predicated region
    $region9: #{rel_partial_decoder_layer.6} parent=5 // pred_check
      _
    $region10: #{rel_partial_decoder_layer.6} parent=5 // pred_check_branch
      %330 = sbr.rel (%p327) target = $region12
    $region11: #{rel_partial_decoder_layer.6} parent=5 // pred_region
      %s331 = ssub.s32 %s17, 1
      // Predicated region
      $region13: #{rel_partial_decoder_layer.6} parent=11 // pred_check
        %p332 = pneg %p130
      $region14: #{rel_partial_decoder_layer.6} parent=11 // pred_check_branch
        %334 = sbr.rel (%p332) target = $region16
      $region15: #{rel_partial_decoder_layer.6} parent=11 // pred_region
        _
      $region16: #{rel_partial_decoder_layer.6} parent=11 // pred_fallthru
        _
      // Predicated region
      $region17: #{rel_partial_decoder_layer.6} parent=11 // pred_check
        %p335 = pneg %p151
      $region18: #{rel_partial_decoder_layer.6} parent=11 // pred_check_branch
        %337 = sbr.rel (%p335) target = $region20
      $region19: #{rel_partial_decoder_layer.6} parent=11 // pred_region
        _
      $region20: #{rel_partial_decoder_layer.6} parent=11 // pred_fallthru
        _
      // Predicated region
      $region21: #{rel_partial_decoder_layer.6} parent=11 // pred_check
        %p338 = pneg %p172
      $region22: #{rel_partial_decoder_layer.6} parent=11 // pred_check_branch
        %340 = sbr.rel (%p338) target = $region24
      $region23: #{rel_partial_decoder_layer.6} parent=11 // pred_region
        _
      $region24: #{rel_partial_decoder_layer.6} parent=11 // pred_fallthru
        _
      // Predicated region
      $region25: #{rel_partial_decoder_layer.6} parent=11 // pred_check
        %p341 = pneg %p198
      $region26: #{rel_partial_decoder_layer.6} parent=11 // pred_check_branch
        %343 = sbr.rel (%p341) target = $region28
      $region27: #{rel_partial_decoder_layer.6} parent=11 // pred_region
        %p344 = scmp.lt.s32.totalorder %s27, 0
        %s345 = scalar_select %p344, %s27, 0
        %s346 = smul.addr %s345, 8
        %s347 = scalar_lea.vmem %s6, %s346
      $region28: #{rel_partial_decoder_layer.6} parent=11 // pred_fallthru
        _
      // Predicated region
      $region29: #{rel_partial_decoder_layer.6} parent=11 // pred_check
        %p348 = pneg %p219
      $region30: #{rel_partial_decoder_layer.6} parent=11 // pred_check_branch
        %350 = sbr.rel (%p348) target = $region32
      $region31: #{rel_partial_decoder_layer.6} parent=11 // pred_region
        _
      $region32: #{rel_partial_decoder_layer.6} parent=11 // pred_fallthru
        _
      // Predicated region
      $region33: #{rel_partial_decoder_layer.6} parent=11 // pred_check
        %p351 = pneg %p268
      $region34: #{rel_partial_decoder_layer.6} parent=11 // pred_check_branch
        %353 = sbr.rel (%p351) target = $region36
      $region35: #{rel_partial_decoder_layer.6} parent=11 // pred_region
        _
      $region36: #{rel_partial_decoder_layer.6} parent=11 // pred_fallthru
        _
      // Predicated region
      $region37: #{rel_partial_decoder_layer.6} parent=11 // pred_check
        %p354 = pneg %p289
      $region38: #{rel_partial_decoder_layer.6} parent=11 // pred_check_branch
        %356 = sbr.rel (%p354) target = $region40
      $region39: #{rel_partial_decoder_layer.6} parent=11 // pred_region
        _
      $region40: #{rel_partial_decoder_layer.6} parent=11 // pred_fallthru
        _
    $region12: #{rel_partial_decoder_layer.6} parent=5 // pred_fallthru
      _
    %p357 = scmp.lt.s32.totalorder %s17, 2
    // Predicated region
    $region41: #{rel_partial_decoder_layer.6} parent=5 // pred_check
      %p358 = pneg %p357
    $region42: #{rel_partial_decoder_layer.6} parent=5 // pred_check_branch
      %360 = sbr.rel (%p358) target = $region44
    $region43: #{rel_partial_decoder_layer.6} parent=5 // pred_region
      // Predicated region
      $region45: #{rel_partial_decoder_layer.6} parent=43 // pred_check
        %p361 = pneg %p51
      $region46: #{rel_partial_decoder_layer.6} parent=43 // pred_check_branch
        %363 = sbr.rel (%p361) target = $region48
      $region47: #{rel_partial_decoder_layer.6} parent=43 // pred_region
        %p364 = scmp.lt.s32.totalorder %s24, 1
        %s365 = scalar_select %p364, %s24, 1
        %p366 = scmp.lt.s32.totalorder %s25, 0
        %s367 = scalar_select %p366, %s25, 0
        %s368 = sadd.s32 %s367, %s365
        %s369 = smul.addr %s368, 4
        %s370 = scalar_lea.vmem %s0, %s369
      $region48: #{rel_partial_decoder_layer.6} parent=43 // pred_fallthru
        _
      // Predicated region
      $region49: #{rel_partial_decoder_layer.6} parent=43 // pred_check
        %p371 = pneg %p77
      $region50: #{rel_partial_decoder_layer.6} parent=43 // pred_check_branch
        %373 = sbr.rel (%p371) target = $region52
      $region51: #{rel_partial_decoder_layer.6} parent=43 // pred_region
        %p374 = scmp.lt.s32.totalorder %s24, 1
        %s375 = scalar_select %p374, %s24, 1
        %s376 = smul.addr %s375, 4
        %s377 = scalar_lea.vmem %s1, %s376
      $region52: #{rel_partial_decoder_layer.6} parent=43 // pred_fallthru
        _
      // Predicated region
      $region53: #{rel_partial_decoder_layer.6} parent=43 // pred_check
        %p378 = pneg %p103
      $region54: #{rel_partial_decoder_layer.6} parent=43 // pred_check_branch
        %380 = sbr.rel (%p378) target = $region56
      $region55: #{rel_partial_decoder_layer.6} parent=43 // pred_region
        %p381 = scmp.lt.s32.totalorder %s24, 1
        %s382 = scalar_select %p381, %s24, 1
        %s383 = smul.addr %s382, 4
        %s384 = scalar_lea.vmem %s2, %s383
      $region56: #{rel_partial_decoder_layer.6} parent=43 // pred_fallthru
        _
      // Predicated region
      $region57: #{rel_partial_decoder_layer.6} parent=43 // pred_check
        %p385 = pneg %p241
      $region58: #{rel_partial_decoder_layer.6} parent=43 // pred_check_branch
        %387 = sbr.rel (%p385) target = $region60
      $region59: #{rel_partial_decoder_layer.6} parent=43 // pred_region
        %p388 = scmp.lt.s32.totalorder %s24, 1
        %s389 = scalar_select %p388, %s24, 1
        %p390 = scmp.lt.s32.totalorder %s25, 0
        %s391 = scalar_select %p390, %s25, 0
        %s392 = sadd.s32 %s391, %s389
        %s393 = smul.addr %s392, 8
        %s394 = scalar_lea.vmem %s8, %s393
      $region60: #{rel_partial_decoder_layer.6} parent=43 // pred_fallthru
        _
    $region44: #{rel_partial_decoder_layer.6} parent=5 // pred_fallthru
      _
    %p395 = scmp.le.s32.totalorder 1, %s17
    %p396 = scmp.lt.s32.totalorder %s17, 3
    %p397 = pnand %p395, %p396
    %p398 = pneg %p397
    // Predicated region
    $region61: #{rel_partial_decoder_layer.6} parent=5 // pred_check
      _
    $region62: #{rel_partial_decoder_layer.6} parent=5 // pred_check_branch
      %400 = sbr.rel (%p397) target = $region64
    $region63: #{rel_partial_decoder_layer.6} parent=5 // pred_region
      %s401 = ssub.s32 %s17, 1
      %p402 = scmp.lt.s32.totalorder %s26, 1
      %s403 = scalar_select %p402, %s26, 1
      %p404 = scmp.lt.s32.totalorder %s27, 0
      %s405 = scalar_select %p404, %s27, 0
      %s406 = sadd.s32 %s405, %s403
      %s407 = smul.addr %s406, 4
      %s408 = scalar_lea.vmem %s0, %s407
      %p409 = pneg %p57
      %p410 = pneg %p54
      %p411 = scmp.lt.s32.totalorder %s26, 1
      %s412 = scalar_select %p411, %s26, 1
      %s413 = smul.addr %s412, 4
      %s414 = scalar_lea.vmem %s1, %s413
      %p415 = pneg %p83
      %p416 = pneg %p80
      %p417 = scmp.lt.s32.totalorder %s26, 1
      %s418 = scalar_select %p417, %s26, 1
      %s419 = smul.addr %s418, 4
      %s420 = scalar_lea.vmem %s2, %s419
      %p421 = pneg %p109
      %p422 = pneg %p106
      %p423 = pneg %p130
      %p424 = pneg %p127
      %p425 = pneg %p151
      %p426 = pneg %p148
      %p427 = pneg %p172
      %p428 = pneg %p169
      %p429 = scmp.lt.s32.totalorder %s27, 0
      %s430 = scalar_select %p429, %s27, 0
      %s431 = smul.addr %s430, 8
      %s432 = scalar_lea.vmem %s6, %s431
      %p433 = pneg %p198
      %p434 = pneg %p195
      %p435 = pneg %p219
      %p436 = pneg %p216
      %p437 = scmp.lt.s32.totalorder %s26, 1
      %s438 = scalar_select %p437, %s26, 1
      %p439 = scmp.lt.s32.totalorder %s27, 0
      %s440 = scalar_select %p439, %s27, 0
      %s441 = sadd.s32 %s440, %s438
      %s442 = smul.addr %s441, 8
      %s443 = scalar_lea.vmem %s8, %s442
      %p444 = pneg %p247
      %p445 = pneg %p244
      %p446 = pneg %p268
      %p447 = pneg %p265
      %p448 = pneg %p289
      %p449 = pneg %p286
      %p450 = pneg %p317
      %p451 = pneg %p314
      %p452 = scmp.lt.s32.totalorder %s26, 1
      %s453 = scalar_select %p452, %s26, 1
      %p454 = scmp.lt.s32.totalorder %s27, 0
      %s455 = scalar_select %p454, %s27, 0
      %s456 = sadd.s32 %s455, %s453
      %s457 = smul.addr %s456, 8
      %s458 = scalar_lea.vmem %s11, %s457
      %p459 = scmp.lt.s32.totalorder %s26, 1
      %s460 = scalar_select %p459, %s26, 1
      %p461 = scmp.lt.s32.totalorder %s27, 0
      %s462 = scalar_select %p461, %s27, 0
      %s463 = sadd.s32 %s462, %s460
      %s464 = smul.addr %s463, 4
      %s465 = scalar_lea.vmem %s0, %s464
      %p466 = scmp.lt.s32.totalorder %s26, 1
      %s467 = scalar_select %p466, %s26, 1
      %s468 = smul.addr %s467, 4
      %s469 = scalar_lea.vmem %s1, %s468
      %p470 = scmp.lt.s32.totalorder %s26, 1
      %s471 = scalar_select %p470, %s26, 1
      %s472 = smul.addr %s471, 4
      %s473 = scalar_lea.vmem %s2, %s472
      %p474 = scmp.lt.s32.totalorder %s27, 0
      %s475 = scalar_select %p474, %s27, 0
      %s476 = smul.addr %s475, 8
      %s477 = scalar_lea.vmem %s6, %s476
      %p478 = scmp.lt.s32.totalorder %s26, 1
      %s479 = scalar_select %p478, %s26, 1
      %p480 = scmp.lt.s32.totalorder %s27, 0
      %s481 = scalar_select %p480, %s27, 0
      %s482 = sadd.s32 %s481, %s479
      %s483 = smul.addr %s482, 8
      %s484 = scalar_lea.vmem %s8, %s483
      %p485 = scmp.lt.s32.totalorder %s26, 1
      %s486 = scalar_select %p485, %s26, 1
      %p487 = scmp.lt.s32.totalorder %s27, 0
      %s488 = scalar_select %p487, %s27, 0
      %s489 = sadd.s32 %s488, %s486
      %s490 = smul.addr %s489, 8
      %s491 = scalar_lea.vmem %s11, %s490
      %s493 = smul.u32 %s27, 8
      %v494 = vld [vmem:[%s477] sm:$0xff]
      %vm495 = vcmp.gt.f32.partialorder %v494, 0.5
      %v496 = vlaneseq
      %v497 = vshrl.u32 %v496, 7
      %v498 = vstv %s493
      %v499 = vadd.s32 %v497, %v498
      %v500 = vadd.s32 %v499, 1
      %vm501 = vcmp.eq.s32.totalorder %v500, 8
      %v502 = vsel %vm501, 0, %v500
      %v503 = vand.u32 %v502, 1
      %vm504 = vcmp.ne.s32.totalorder %v503, 0
      %v505 = vand.u32 %v502, 2
      %vm506 = vcmp.ne.s32.totalorder %v505, 0
      %v507 = vand.u32 %v502, 4
      %vm508 = vcmp.ne.s32.totalorder %v507, 0
      %v509 = vld [vmem:[%s465] sm:$0xf]
      %v510 = vunpack.c.l.bf16 %v509
      %v511 = vld [vmem:[%s4] sm:$0x1]
      %v513 = vperm.slane %v511, 0
      %v515 = vadd.f32 %v510, %v513
      %v516 = vmul.f32 %v515, 0.25
      %v517 = vpack.c.bf16 %v516, %v516
      %v518 = vld [vmem:[%s5] sm:$0x1]
      %v520 = vperm.slane %v518, 0
      %v522 = vadd.f32 %v510, %v520
      %v523 = vmul.f32 %v522, 0.25
      %v524 = vpack.c.bf16 %v523, %v523
      %v525 = vld [vmem:[%s469] sm:$0xf]
      %v526 = vld [vmem:[%s3] sm:$0xf]
      %vm527 = vcmask 130048
      %v529 = vsel %vm527, %v524, 0
      %v532 = vsel %vm527, %v526, 0
      %534 = vmatpush.bf16.xpose.msra.mxu0 0
      %535 = vmatpush.bf16.xpose.msra.mxu0 0
      %536 = vmatpush.bf16.xpose.msra.mxu0 0
      %537 = vmatpush.bf16.xpose.msra.mxu0 0
      %538 = vmatpush.bf16.xpose.msra.mxu0 0
      %539 = vmatpush.bf16.xpose.msra.mxu0 0
      %540 = vmatpush.bf16.xpose.msra.mxu0 0
      %541 = vmatpush.bf16.xpose.msra.mxu0 %v532
      %542 = vmatmul.bf16.gmra.mxu0 %v529
      %v543 = vpop.f32.mrf.mxu0
      %v544 = vadd.f32 0.0, %v543
      %v545 = vpop.f32.mrf.mxu0
      %546 = vdwg.mxu0
      %548 = vrot.lane.b32.xlu0 %v544, 121
      %v549 = vpop.permute.xlu0 %548
      %551 = vrot.lane.b32.xlu0 %v544, 1
      %v552 = vpop.permute.xlu0 %551
      %vm554 = vcmask 7168
      %v555 = vsel %vm554, %v549, %v552
      %v556 = vsel %vm504, %v555, %v544
      %558 = vrot.lane.b32.xlu0 %v556, 122
      %v559 = vpop.permute.xlu0 %558
      %561 = vrot.lane.b32.xlu0 %v556, 2
      %v562 = vpop.permute.xlu0 %561
      %vm564 = vcmask 15360
      %v565 = vsel %vm564, %v559, %v562
      %v566 = vsel %vm506, %v565, %v556
      %568 = vrot.lane.b32.xlu0 %v566, 124
      %v569 = vpop.permute.xlu0 %568
      %571 = vrot.lane.b32.xlu0 %v566, 4
      %v572 = vpop.permute.xlu0 %571
      %vm574 = vcmask 31744
      %v575 = vsel %vm574, %v569, %v572
      %v576 = vsel %vm508, %v575, %v566
      %v578 = vsel %vm527, %v517, 0
      %v581 = vsel %vm527, %v525, 0
      %583 = vmatpush.bf16.xpose.msra.mxu0 0
      %584 = vmatpush.bf16.xpose.msra.mxu0 0
      %585 = vmatpush.bf16.xpose.msra.mxu0 0
      %586 = vmatpush.bf16.xpose.msra.mxu0 0
      %587 = vmatpush.bf16.xpose.msra.mxu0 0
      %588 = vmatpush.bf16.xpose.msra.mxu0 0
      %589 = vmatpush.bf16.xpose.msra.mxu0 0
      %590 = vmatpush.bf16.xpose.msra.mxu0 %v581
      %591 = vmatmul.bf16.gmra.mxu0 %v578
      %v592 = vpop.f32.mrf.mxu0
      %v593 = vadd.f32 %v576, %v592
      %v594 = vpop.f32.mrf.mxu0
      %595 = vdwg.mxu0
      %v596 = vsel %vm495, -1e+30, %v593
      %vm597 = vcmask 64512
      %v598 = vsel %vm597, %v596, -inf
      %599 = vmax.xlane.f32.xlu0 %v598
      %v600 = vpop.xlane.xlu0 %599
      %v601 = vsub.f32 %v596, %v600
      %v602 = vmul.f32 %v601, 1.442695
      %v603 = vpow.pop %v602
      %v604 = vsel %vm597, %v603, 0.0
      %605 = vadd.xlane.f32.xlu0 %v604
      %v606 = vpop.xlane.xlu0 %605
      %v607 = vrcp.pop %v606
      %v608 = vmul.f32 %v603, %v607
      %v609 = vpack.c.bf16 %v608, %v608
      %v610 = vld [vmem:[%s473] sm:$0xf]
      %v612 = vsel %vm597, %v609, 0
      %vm614 = vcmask 1043456
      %v616 = vsel %vm614, %v610, 0
      %618 = vmatpush.bf16.msra.mxu0 0
      %619 = vmatpush.bf16.msra.mxu0 0
      %620 = vmatpush.bf16.msra.mxu0 0
      %621 = vmatpush.bf16.msra.mxu0 0
      %622 = vmatpush.bf16.msra.mxu0 0
      %623 = vmatpush.bf16.msra.mxu0 0
      %624 = vmatpush.bf16.msra.mxu0 0
      %625 = vmatpush.bf16.msra.mxu0 %v616
      %626 = vmatmul.bf16.gmra.mxu0 %v612
      %v627 = vpop.f32.mrf.mxu0
      %v628 = vadd.f32 0.0, %v627
      %v629 = vpop.f32.mrf.mxu0
      %630 = vdwg.mxu0
      %632 = vrot.lane.b32.xlu0 %v524, 112
      %v633 = vpop.permute.xlu0 %632
      %v635 = vunpack.c.l.b16 %v526
      %v636 = vpack.c.b16 %v635, %v635
      %637 = vrot.lane.b32.xlu0 %v636, 112
      %v638 = vpop.permute.xlu0 %637
      %v640 = vsel %vm527, %v633, 0
      %v643 = vsel %vm527, %v638, 0
      %645 = vmatpush.bf16.xpose.msra.mxu0 0
      %646 = vmatpush.bf16.xpose.msra.mxu0 0
      %647 = vmatpush.bf16.xpose.msra.mxu0 0
      %648 = vmatpush.bf16.xpose.msra.mxu0 0
      %649 = vmatpush.bf16.xpose.msra.mxu0 0
      %650 = vmatpush.bf16.xpose.msra.mxu0 0
      %651 = vmatpush.bf16.xpose.msra.mxu0 0
      %652 = vmatpush.bf16.xpose.msra.mxu0 %v643
      %653 = vmatmul.bf16.gmra.mxu0 %v640
      %v654 = vpop.f32.mrf.mxu0
      %v655 = vadd.f32 0.0, %v654
      %v656 = vpop.f32.mrf.mxu0
      %657 = vdwg.mxu0
      %659 = vrot.lane.b32.xlu0 %v655, 121
      %v660 = vpop.permute.xlu0 %659
      %662 = vrot.lane.b32.xlu0 %v655, 1
      %v663 = vpop.permute.xlu0 %662
      %v665 = vsel %vm554, %v660, %v663
      %v666 = vsel %vm504, %v665, %v655
      %668 = vrot.lane.b32.xlu0 %v666, 122
      %v669 = vpop.permute.xlu0 %668
      %671 = vrot.lane.b32.xlu0 %v666, 2
      %v672 = vpop.permute.xlu0 %671
      %v674 = vsel %vm564, %v669, %v672
      %v675 = vsel %vm506, %v674, %v666
      %677 = vrot.lane.b32.xlu0 %v675, 124
      %v678 = vpop.permute.xlu0 %677
      %680 = vrot.lane.b32.xlu0 %v675, 4
      %v681 = vpop.permute.xlu0 %680
      %v683 = vsel %vm574, %v678, %v681
      %v684 = vsel %vm508, %v683, %v675
      %686 = vrot.lane.b32.xlu0 %v517, 112
      %v687 = vpop.permute.xlu0 %686
      %v689 = vunpack.c.l.b16 %v525
      %v690 = vpack.c.b16 %v689, %v689
      %691 = vrot.lane.b32.xlu0 %v690, 112
      %v692 = vpop.permute.xlu0 %691
      %v694 = vsel %vm527, %v687, 0
      %v697 = vsel %vm527, %v692, 0
      %699 = vmatpush.bf16.xpose.msra.mxu0 0
      %700 = vmatpush.bf16.xpose.msra.mxu0 0
      %701 = vmatpush.bf16.xpose.msra.mxu0 0
      %702 = vmatpush.bf16.xpose.msra.mxu0 0
      %703 = vmatpush.bf16.xpose.msra.mxu0 0
      %704 = vmatpush.bf16.xpose.msra.mxu0 0
      %705 = vmatpush.bf16.xpose.msra.mxu0 0
      %706 = vmatpush.bf16.xpose.msra.mxu0 %v697
      %707 = vmatmul.bf16.gmra.mxu0 %v694
      %v708 = vpop.f32.mrf.mxu0
      %v709 = vadd.f32 %v684, %v708
      %v710 = vpop.f32.mrf.mxu0
      %711 = vdwg.mxu0
      %v712 = vsel %vm495, -1e+30, %v709
      %v713 = vsel %vm597, %v712, -inf
      %714 = vmax.xlane.f32.xlu0 %v713
      %v715 = vpop.xlane.xlu0 %714
      %v716 = vsub.f32 %v712, %v715
      %v717 = vmul.f32 %v716, 1.442695
      %v718 = vpow.pop %v717
      %v719 = vsel %vm597, %v718, 0.0
      %720 = vadd.xlane.f32.xlu0 %v719
      %v721 = vpop.xlane.xlu0 %720
      %v722 = vrcp.pop %v721
      %v723 = vmul.f32 %v718, %v722
      %v724 = vpack.c.bf16 %v723, %v723
      %v726 = vunpack.c.l.b16 %v610
      %v727 = vpack.c.b16 %v726, %v726
      %728 = vrot.lane.b32.xlu0 %v727, 112
      %v729 = vpop.permute.xlu0 %728
      %v731 = vsel %vm597, %v724, 0
      %v734 = vsel %vm614, %v729, 0
      %736 = vmatpush.bf16.msra.mxu0 0
      %737 = vmatpush.bf16.msra.mxu0 0
      %738 = vmatpush.bf16.msra.mxu0 0
      %739 = vmatpush.bf16.msra.mxu0 0
      %740 = vmatpush.bf16.msra.mxu0 0
      %741 = vmatpush.bf16.msra.mxu0 0
      %742 = vmatpush.bf16.msra.mxu0 0
      %743 = vmatpush.bf16.msra.mxu0 %v734
      %744 = vmatmul.bf16.gmra.mxu0 %v731
      %v745 = vpop.f32.mrf.mxu0
      %v746 = vadd.f32 0.0, %v745
      %v747 = vpop.f32.mrf.mxu0
      %748 = vdwg.mxu0
      %750 = vrot.lane.b32.xlu0 %v746, 16
      %v751 = vpop.permute.xlu0 %750
      %v753 = vsel %vm527, %v628, %v751
      %v754 = vpack.c.bf16 %v753, %v753
      %v755 = vld [vmem:[%s7] sm:$0xf]
      %v756 = vld [vmem:[%s7 + $0x4] sm:$0xf]
      %v757 = vld [vmem:[%s7 + $0x8] sm:$0xf]
      %v758 = vld [vmem:[%s7 + $0xc] sm:$0xf]
      %v763 = vunpack.c.l.b16 %v755
      %v764 = vunpack.c.l.b16 %v756
      %v765 = vunpack.c.l.b16 %v757
      %v766 = vunpack.c.l.b16 %v758
      %v767 = vpack.c.b16 %v764, %v763
      %v768 = vpack.c.b16 %v766, %v765
      %vm771 = vcmask 261120
      %v773 = vsel %vm771, %v754, 0
      %775 = vmatpush.bf16.msra.mxu0 0
      %776 = vmatpush.bf16.msra.mxu0 0
      %777 = vmatpush.bf16.msra.mxu0 0
      %778 = vmatpush.bf16.msra.mxu0 0
      %779 = vmatpush.bf16.msra.mxu0 0
      %780 = vmatpush.bf16.msra.mxu0 0
      %781 = vmatpush.bf16.msra.mxu0 %v768
      %782 = vmatpush.bf16.msra.mxu0 %v767
      %783 = vmatmul.bf16.gmra.mxu0 %v773
      %v784 = vpop.f32.mrf.mxu0
      %v785 = vadd.f32 0.0, %v784
      %v786 = vpop.f32.mrf.mxu0
      %787 = vdwg.mxu0
      %v788 = vld [vmem:[%s484] sm:$0xff]
      %v789 = vadd.f32 %v788, %v785
      %v790 = vsel %vm771, %v789, 0.0
      %791 = vadd.xlane.f32.xlu0 %v790
      %v792 = vpop.xlane.xlu0 %791
      %v793 = vrcp.pop 32.0
      %v794 = vmul.f32 32.0, %v793
      %v795 = vsub.f32 1.0, %v794
      %v796 = vmul.f32 %v793, %v795
      %v797 = vadd.f32 %v793, %v796
      %vm798 = vweird.f32 %v793
      %v799 = vsel %vm798, %v793, %v797
      %v800 = vmul.f32 %v792, %v799
      %v801 = vsub.f32 %v789, %v800
      %v802 = vmul.f32 %v801, %v801
      %v803 = vsel %vm771, %v802, 0.0
      %804 = vadd.xlane.f32.xlu0 %v803
      %v805 = vpop.xlane.xlu0 %804
      %v806 = vmul.f32 %v805, %v799
      %v807 = vadd.f32 %v806, 1e-05
      %v808 = vrsqrt.pop %v807
      %v809 = vmul.f32 %v808, %v807
      %v810 = vmul.f32 %v809, %v808
      %v811 = vmul.f32 0.5, %v810
      %v812 = vsub.f32 1.5, %v811
      %v813 = vmul.f32 %v808, %v812
      %vm814 = vweird.f32 %v807
      %vm815 = vweird.f32 %v808
      %vm816 = vmor %vm814, %vm815
      %v817 = vsel %vm816, %v808, %v813
      %v818 = vmul.f32 %v801, %v817
      %v819 = vld [vmem:[%s9] sm:$0x1]
      %v821 = vperm.slane %v819, 0
      %v823 = vmul.f32 %v818, %v821
      %v824 = vld [vmem:[%s10] sm:$0x1]
      %v826 = vperm.slane %v824, 0
      %v828 = vadd.f32 %v823, %v826
      %829 = vst.msk [vmem:[%s491] sm:$0xff] %vm771, %v828
      %p830 = scmp.lt.s32.totalorder %s26, 1
      %s831 = scalar_select %p830, %s26, 1
      %p832 = scmp.lt.s32.totalorder %s27, 0
      %s833 = scalar_select %p832, %s27, 0
      %s834 = sadd.s32 %s833, %s831
      %s835 = smul.addr %s834, 8
      %s836 = scalar_lea.vmem %s11, %s835
      // Predicated region
      $region65: #{rel_partial_decoder_layer.6} parent=63 // pred_check
        %p837 = pneg %p314
      $region66: #{rel_partial_decoder_layer.6} parent=63 // pred_check_branch
        %839 = sbr.rel (%p837) target = $region68
      $region67: #{rel_partial_decoder_layer.6} parent=63 // pred_region
        _
      $region68: #{rel_partial_decoder_layer.6} parent=63 // pred_fallthru
        _
    $region64: #{rel_partial_decoder_layer.6} parent=5 // pred_fallthru
      _
    %p840 = scmp.le.s32.totalorder 2, %s17
    // Predicated region
    $region69: #{rel_partial_decoder_layer.6} parent=5 // pred_check
      %p841 = pneg %p840
    $region70: #{rel_partial_decoder_layer.6} parent=5 // pred_check_branch
      %843 = sbr.rel (%p841) target = $region72
    $region71: #{rel_partial_decoder_layer.6} parent=5 // pred_region
      %s844 = ssub.s32 %s17, 2
      // Predicated region
      $region73: #{rel_partial_decoder_layer.6} parent=71 // pred_check
        %p845 = pneg %p320
      $region74: #{rel_partial_decoder_layer.6} parent=71 // pred_check_branch
        %847 = sbr.rel (%p845) target = $region76
      $region75: #{rel_partial_decoder_layer.6} parent=71 // pred_region
        %p848 = scmp.lt.s32.totalorder %s28, 1
        %s849 = scalar_select %p848, %s28, 1
        %p850 = scmp.lt.s32.totalorder %s29, 0
        %s851 = scalar_select %p850, %s29, 0
        %s852 = sadd.s32 %s851, %s849
        %s853 = smul.addr %s852, 8
        %s854 = scalar_lea.vmem %s11, %s853
      $region76: #{rel_partial_decoder_layer.6} parent=71 // pred_fallthru
        _
    $region72: #{rel_partial_decoder_layer.6} parent=5 // pred_fallthru
      _
  $region6: #{rel_partial_decoder_layer.6} parent=0 // loop_footer
    %s21 = sadd.s32 1, %s17
  $region7: #{rel_partial_decoder_layer.6} parent=0 // loop_footer_branch
    %16 = sbr.rel target = $region3
  $region8: #{rel_partial_decoder_layer.6} parent=0 // loop_exit
    _

</llo_original>
